<compile_context>
chip_gen: v7x
topology: tpu7x:2x2x1
jax: 0.10.0
libtpu: 0.0.40
codegen_flags: <defaults>
</compile_context>

<pallas_src>
import functools

import jax
import jax.numpy as jnp
from jax.experimental import pallas as pl
from jax.experimental.pallas import tpu as pltpu


def _round_up(x, m):
    return (x + m - 1) // m * m


def _gru_kernel(x_ref, w_ih_ref, b_gi_ref, w_hh_ref, bh_n_ref, w_fc_ref, b_fc_ref,
                out_ref, gi_ref, h_ref, *, Tc, Hp, BT, T_valid, mask_tail, unroll):
    c = pl.program_id(1)
    num_chunks = pl.num_programs(1)

    @pl.when(c == 0)
    def _():
        h_ref[...] = jnp.zeros_like(h_ref)

    # ---- fused input projection for the whole time chunk: one MXU matmul ----
    # (Tc*BT, Ip) @ (Ip, 3Hp) -> VMEM scratch; replaces the precomputed-gi HBM stream.
    x_chunk = x_ref[...]                                        # (Tc, BT, Ip)
    xs = x_chunk.reshape(Tc * BT, x_chunk.shape[-1])            # leading-dim collapse
    gi_ref[...] = (jnp.dot(xs, w_ih_ref[...],
                           preferred_element_type=jnp.float32) + b_gi_ref[...])

    # Loop-invariant operands hoisted out of the recurrence (JAX does not CSE
    # broadcast_in_dim, so broadcast the n-gate hidden bias once per chunk).
    w_hh = w_hh_ref[...]                                        # (Hp, 3Hp) [r|z|n]
    bh_n = jnp.broadcast_to(bh_n_ref[...], (BT, Hp))            # (BT, Hp)

    def step(t, h):
        row = pl.multiple_of(t * BT, BT)
        gi = gi_ref[pl.ds(row, BT), :]                          # (BT, 3Hp)
        # Single fused hidden-side gate matmul; only RHS inside the loop.
        gh = jnp.dot(h, w_hh, preferred_element_type=jnp.float32)
        r = jax.nn.sigmoid(gi[:, :Hp] + gh[:, :Hp])
        z = jax.nn.sigmoid(gi[:, Hp:2 * Hp] + gh[:, Hp:2 * Hp])
        n = jnp.tanh(gi[:, 2 * Hp:] + r * (gh[:, 2 * Hp:] + bh_n))
        h_new = n + z * (h - n)                                 # == (1-z)*n + z*h
        if mask_tail:
            # Identity update on time-padding steps (T padded up to multiple of Tc).
            m = (c * Tc + t < T_valid).astype(jnp.float32)      # scalar 0/1
            h_new = h + m * (h_new - h)
        return h_new

    h = jax.lax.fori_loop(0, Tc, step, h_ref[...], unroll=unroll)
    h_ref[...] = h

    @pl.when(c == num_chunks - 1)
    def _():
        logits = jnp.dot(h, w_fc_ref[...],
                         preferred_element_type=jnp.float32) + b_fc_ref[...]
        out_ref[...] = jax.nn.sigmoid(logits)                   # lane-dense (BT, 128)


def gru_classifier_forward(x, params):
    """x: (B, T, input_size) float32  ->  (B, 1) float32 probabilities."""
    w_ih = params["weight_ih"]    # (3H, I)  PyTorch layout, gate order [r, z, n]
    w_hh = params["weight_hh"]    # (3H, H)
    b_ih = params["bias_ih"]      # (3H,)
    b_hh = params["bias_hh"]      # (3H,)
    w_fc = params["fc_weight"]    # (1, H)
    b_fc = params["fc_bias"]      # (1,)

    B, T, I = x.shape
    H = w_hh.shape[1]
    Hp = _round_up(H, 128)
    G3 = 3 * Hp
    Ip = _round_up(I, 128)        # MXU/lane-native shapes for the fused projection

    # ---- batch tiling: >=2 tiles when possible so v7x's second TC gets work ----
    Bp = _round_up(B, 8)
    if Bp >= 16:
        BT = min(128, _round_up((Bp + 1) // 2, 8))
        Bp = _round_up(Bp, BT)
    else:
        BT = Bp

    # ---- time chunk: VMEM-budget driven (gi scratch + 2x-buffered x chunk) ----
    per_tc_bytes = BT * (G3 * 4 + 2 * Ip * 4)
    vmem_budget = 10 * 1024 * 1024                 # leaves headroom under all defaults
    Tc = max(1, min(64, vmem_budget // per_tc_bytes, T))
    if Tc >= 4:
        Tc = (Tc // 4) * 4                          # plays nicely with partial unroll
    T_pad = _round_up(T, Tc)
    mask_tail = (T_pad != T)
    unroll = min(Tc, 8 if BT <= 32 else 4)

    # ---- pack / pad weights (gate-major [r|z|n], pre-transposed for x @ W) ----
    def gates(a):
        return [a[g * H:(g + 1) * H] for g in range(3)]

    wi_r, wi_z, wi_n = gates(w_ih)
    wh_r, wh_z, wh_n = gates(w_hh)
    bi_r, bi_z, bi_n = gates(b_ih)
    bh_r, bh_z, bh_n = gates(b_hh)

    def pad_i(m):   # (I, H) -> (Ip, Hp)
        return jnp.pad(m, ((0, Ip - I), (0, Hp - H)))

    def pad_h(m):   # (H, H) -> (Hp, Hp)
        return jnp.pad(m, ((0, Hp - H), (0, Hp - H)))

    def pad_v(v):   # (H,) -> (Hp,)
        return jnp.pad(v, (0, Hp - H))

    w_ih_s = jnp.concatenate([pad_i(wi_r.T), pad_i(wi_z.T), pad_i(wi_n.T)], axis=1)
    w_hh_s = jnp.concatenate([pad_h(wh_r.T), pad_h(wh_z.T), pad_h(wh_n.T)], axis=1)

    # Fold b_ih + b_hh for r/z (they add outside the r* term); keep b_hh[n]
    # hidden-side because it sits inside r * (h @ W_hh_n + b_hh_n).
    b_gi = jnp.concatenate([pad_v(bi_r + bh_r), pad_v(bi_z + bh_z),
                            pad_v(bi_n)]).reshape(1, G3)
    bh_n_p = pad_v(bh_n).reshape(1, Hp)

    w_fc_p = jnp.zeros((Hp, 128), jnp.float32).at[:H, 0].set(w_fc[0])
    b_fc_p = jnp.zeros((1, 128), jnp.float32).at[0, 0].set(b_fc[0])

    # ---- input: time-major, zero-padded (batch, time, feature); projection fused ----
    x_tbi = jnp.transpose(x, (1, 0, 2)).astype(jnp.float32)      # (T, B, I)
    x_p = jnp.pad(x_tbi, ((0, T_pad - T), (0, Bp - B), (0, Ip - I)))

    kernel = functools.partial(_gru_kernel, Tc=Tc, Hp=Hp, BT=BT, T_valid=T,
                               mask_tail=mask_tail, unroll=unroll)

    out = pl.pallas_call(
        kernel,
        out_shape=jax.ShapeDtypeStruct((Bp, 128), jnp.float32),
        grid_spec=pltpu.PrefetchScalarGridSpec(
            num_scalar_prefetch=0,
            grid=(Bp // BT, T_pad // Tc),
            in_specs=[
                pl.BlockSpec((Tc, BT, Ip), lambda b, c: (c, b, 0)),   # x time-chunk
                pl.BlockSpec((Ip, G3), lambda b, c: (0, 0)),          # fused W_ih
                pl.BlockSpec((1, G3), lambda b, c: (0, 0)),           # folded input bias
                pl.BlockSpec((Hp, G3), lambda b, c: (0, 0)),          # fused W_hh
                pl.BlockSpec((1, Hp), lambda b, c: (0, 0)),           # b_hh (n gate only)
                pl.BlockSpec((Hp, 128), lambda b, c: (0, 0)),         # W_fc (lane-padded)
                pl.BlockSpec((1, 128), lambda b, c: (0, 0)),          # b_fc (lane-padded)
            ],
            out_specs=pl.BlockSpec((BT, 128), lambda b, c: (b, 0)),
            scratch_shapes=[pltpu.VMEM((Tc * BT, G3), jnp.float32),   # gi chunk
                            pltpu.VMEM((BT, Hp), jnp.float32)],       # hidden state
        ),
        compiler_params=pltpu.CompilerParams(
            dimension_semantics=("parallel", "arbitrary"),            # recurrence over chunks
            vmem_limit_bytes=32 * 1024 * 1024),
    )(x_p, w_ih_s, b_gi, w_hh_s, bh_n_p, w_fc_p, b_fc_p)

    return out[:B, 0:1]


def init_params(key, input_size=6, hidden_size=64):
    """Deterministic init mirroring PyTorch GRU/Linear shapes (uniform(-1/sqrt(H), 1/sqrt(H)))."""
    ks = jax.random.split(key, 6)
    bound = 1.0 / float(hidden_size) ** 0.5

    def u(k, shape):
        return jax.random.uniform(k, shape, jnp.float32, -bound, bound)

    return {
        "weight_ih": u(ks[0], (3 * hidden_size, input_size)),
        "weight_hh": u(ks[1], (3 * hidden_size, hidden_size)),
        "bias_ih": u(ks[2], (3 * hidden_size,)),
        "bias_hh": u(ks[3], (3 * hidden_size,)),
        "fc_weight": u(ks[4], (1, hidden_size)),
        "fc_bias": u(ks[5], (1,)),
    }


def reference_forward(x, params):
    """Plain-JAX reference of the PyTorch GRUClassifier forward."""
    w_ih, w_hh = params["weight_ih"], params["weight_hh"]
    b_ih, b_hh = params["bias_ih"], params["bias_hh"]
    H = w_hh.shape[1]

    def step(h, x_t):
        gi = x_t @ w_ih.T + b_ih          # (B, 3H)
        gh = h @ w_hh.T + b_hh            # (B, 3H)
        r = jax.nn.sigmoid(gi[:, :H] + gh[:, :H])
        z = jax.nn.sigmoid(gi[:, H:2 * H] + gh[:, H:2 * H])
        n = jnp.tanh(gi[:, 2 * H:] + r * gh[:, 2 * H:])
        return (1.0 - z) * n + z * h, None

    B = x.shape[0]
    h0 = jnp.zeros((B, H), jnp.float32)
    h, _ = jax.lax.scan(step, h0, jnp.transpose(x, (1, 0, 2)))
    return jax.nn.sigmoid(h @ params["fc_weight"].T + params["fc_bias"])


if __name__ == "__main__":
    B, T, INPUT, HIDDEN = 2, 8, 6, 64

    key = jax.random.PRNGKey(0)
    k_x, k_p, k_x2 = jax.random.split(key, 3)
    x = jax.random.normal(k_x, (B, T, INPUT), jnp.float32)
    params = init_params(k_p, INPUT, HIDDEN)

    out = jax.block_until_ready(gru_classifier_forward(x, params))
    ref = reference_forward(x, params)
    assert out.shape == (B, 1), out.shape
    assert jnp.allclose(out, ref, rtol=1e-4, atol=1e-4), (out, ref)

    # Second check: multiple batch tiles, multiple time chunks, and a padded time
    # tail (T % Tc != 0) exercising the identity-step masking path.
    B2, T2 = 20, 70
    x2 = jax.random.normal(k_x2, (B2, T2, INPUT), jnp.float32)
    out2 = jax.block_until_ready(gru_classifier_forward(x2, params))
    ref2 = reference_forward(x2, params)
    assert out2.shape == (B2, 1), out2.shape
    assert jnp.allclose(out2, ref2, rtol=2e-3, atol=2e-3), (out2, ref2)

    print("KERNEL_OK")
</pallas_src>

<mosaic_0001>
module attributes {stable_mosaic.version = 11 : i64} {
  func.func @_gru_kernel(%arg0: i32, %arg1: i32, %arg2: memref<8x8x128xf32, #tpu.memory_space<vmem>>, %arg3: memref<128x384xf32, #tpu.memory_space<vmem>>, %arg4: memref<1x384xf32, #tpu.memory_space<vmem>>, %arg5: memref<128x384xf32, #tpu.memory_space<vmem>>, %arg6: memref<1x128xf32, #tpu.memory_space<vmem>>, %arg7: memref<128x128xf32, #tpu.memory_space<vmem>>, %arg8: memref<1x128xf32, #tpu.memory_space<vmem>>, %arg9: memref<8x128xf32, #tpu.memory_space<vmem>>, %arg10: memref<64x384xf32, #tpu.memory_space<vmem>>, %arg11: memref<8x128xf32, #tpu.memory_space<vmem>>) attributes {dimension_semantics = [#tpu.dimension_semantics<parallel>, #tpu.dimension_semantics<arbitrary>], iteration_bounds = array<i64: 1, 1>, scalar_prefetch = 0 : i64, scratch_operands = 2 : i64, tpu.core_type = #tpu.core_type<tc>, window_params = [{transform_indices = @transform_0, window_bounds = array<i64: 8, 8, 128>}, {pipeline_mode = #tpu.pipeline_mode<synchronous>, transform_indices = @transform_1, window_bounds = array<i64: 128, 384>}, {pipeline_mode = #tpu.pipeline_mode<synchronous>, transform_indices = @transform_2, window_bounds = array<i64: 1, 384>}, {pipeline_mode = #tpu.pipeline_mode<synchronous>, transform_indices = @transform_3, window_bounds = array<i64: 128, 384>}, {pipeline_mode = #tpu.pipeline_mode<synchronous>, transform_indices = @transform_4, window_bounds = array<i64: 1, 128>}, {pipeline_mode = #tpu.pipeline_mode<synchronous>, transform_indices = @transform_5, window_bounds = array<i64: 128, 128>}, {pipeline_mode = #tpu.pipeline_mode<synchronous>, transform_indices = @transform_6, window_bounds = array<i64: 1, 128>}, {transform_indices = @transform_7, window_bounds = array<i64: 8, 128>}]} {
    %c0_i32 = arith.constant 0 : i32
    %0 = arith.cmpi eq, %arg1, %c0_i32 : i32
    %1 = arith.extui %0 : i1 to i32
    %c0_i32_0 = arith.constant 0 : i32
    %2 = arith.cmpi ne, %1, %c0_i32_0 : i32
    scf.if %2 {
      %cst_60 = arith.constant 0.000000e+00 : f32
      %260 = vector.broadcast %cst_60 : f32 to vector<8x128xf32>
      %c0_61 = arith.constant 0 : index
      %c0_62 = arith.constant 0 : index
      %261 = vector.load %arg11[%c0_61, %c0_62] : memref<8x128xf32, #tpu.memory_space<vmem>>, vector<8x128xf32>
      tpu.vector_store %arg11[%c0_61, %c0_62], %260 {strides = array<i32>} : memref<8x128xf32, #tpu.memory_space<vmem>>, vector<8x128xf32>,
    } else {
    }
    %c0 = arith.constant 0 : index
    %c0_1 = arith.constant 0 : index
    %c0_2 = arith.constant 0 : index
    %3 = vector.load %arg2[%c0, %c0_1, %c0_2] : memref<8x8x128xf32, #tpu.memory_space<vmem>>, vector<8x8x128xf32>
    %4 = vector.shape_cast %3 : vector<8x8x128xf32> to vector<64x128xf32>
    %c0_3 = arith.constant 0 : index
    %c0_4 = arith.constant 0 : index
    %5 = vector.load %arg3[%c0_3, %c0_4] : memref<128x384xf32, #tpu.memory_space<vmem>>, vector<128x384xf32>
    %cst = arith.constant dense<0.000000e+00> : vector<64x384xf32>
    %6 = tpu.matmul %4, %5, %cst {dimension_numbers = #tpu.dot_dimension_numbers<[1], [0], [0], [1], [0, 0, 1, 1], [], []>} : vector<64x128xf32>, vector<128x384xf32>, vector<64x384xf32> -> vector<64x384xf32>
    %c0_5 = arith.constant 0 : index
    %c0_6 = arith.constant 0 : index
    %7 = vector.load %arg4[%c0_5, %c0_6] : memref<1x384xf32, #tpu.memory_space<vmem>>, vector<1x384xf32>
    %8 = vector.broadcast %7 : vector<1x384xf32> to vector<64x384xf32>
    %9 = arith.addf %6, %8 : vector<64x384xf32>
    %c0_7 = arith.constant 0 : index
    %c0_8 = arith.constant 0 : index
    %10 = vector.load %arg10[%c0_7, %c0_8] : memref<64x384xf32, #tpu.memory_space<vmem>>, vector<64x384xf32>
    tpu.vector_store %arg10[%c0_7, %c0_8], %9 {strides = array<i32>} : memref<64x384xf32, #tpu.memory_space<vmem>>, vector<64x384xf32>,
    %c0_9 = arith.constant 0 : index
    %c0_10 = arith.constant 0 : index
    %11 = vector.load %arg5[%c0_9, %c0_10] : memref<128x384xf32, #tpu.memory_space<vmem>>, vector<128x384xf32>
    %c0_11 = arith.constant 0 : index
    %c0_12 = arith.constant 0 : index
    %12 = vector.load %arg6[%c0_11, %c0_12] : memref<1x128xf32, #tpu.memory_space<vmem>>, vector<1x128xf32>
    %13 = vector.shape_cast %12 : vector<1x128xf32> to vector<1x128xf32>
    %14 = vector.broadcast %13 : vector<1x128xf32> to vector<8x128xf32>
    %c0_13 = arith.constant 0 : index
    %c0_14 = arith.constant 0 : index
    %15 = vector.load %arg11[%c0_13, %c0_14] : memref<8x128xf32, #tpu.memory_space<vmem>>, vector<8x128xf32>
    %c0_i32_15 = arith.constant 0 : i32
    %c8_i32 = arith.constant 8 : i32
    %16 = arith.muli %c0_i32_15, %c8_i32 : i32
    %17 = tpu.assume_multiple %16, 8 : i32
    %18 = arith.index_cast %17 : i32 to index
    %c0_16 = arith.constant 0 : index
    %19 = vector.load %arg10[%18, %c0_16] : memref<64x384xf32, #tpu.memory_space<vmem>>, vector<8x384xf32>
    %cst_17 = arith.constant dense<0.000000e+00> : vector<8x384xf32>
    %20 = tpu.matmul %15, %11, %cst_17 {dimension_numbers = #tpu.dot_dimension_numbers<[1], [0], [0], [1], [0, 0, 1, 1], [], []>} : vector<8x128xf32>, vector<128x384xf32>, vector<8x384xf32> -> vector<8x384xf32>
    %21 = vector.extract_strided_slice %19 {offsets = [0, 0], sizes = [8, 128], strides = [1, 1]} : vector<8x384xf32> to vector<8x128xf32>
    %22 = vector.extract_strided_slice %20 {offsets = [0, 0], sizes = [8, 128], strides = [1, 1]} : vector<8x384xf32> to vector<8x128xf32>
    %23 = arith.addf %21, %22 : vector<8x128xf32>
    %24 = arith.negf %23 : vector<8x128xf32>
    %25 = math.exp %24 : vector<8x128xf32>
    %cst_18 = arith.constant 1.000000e+00 : f32
    %26 = vector.broadcast %cst_18 : f32 to vector<8x128xf32>
    %27 = arith.addf %26, %25 : vector<8x128xf32>
    %28 = arith.divf %26, %27 : vector<8x128xf32>
    %29 = vector.extract_strided_slice %19 {offsets = [0, 128], sizes = [8, 128], strides = [1, 1]} : vector<8x384xf32> to vector<8x128xf32>
    %30 = vector.extract_strided_slice %20 {offsets = [0, 128], sizes = [8, 128], strides = [1, 1]} : vector<8x384xf32> to vector<8x128xf32>
    %31 = arith.addf %29, %30 : vector<8x128xf32>
    %32 = arith.negf %31 : vector<8x128xf32>
    %33 = math.exp %32 : vector<8x128xf32>
    %cst_19 = arith.constant 1.000000e+00 : f32
    %34 = vector.broadcast %cst_19 : f32 to vector<8x128xf32>
    %35 = arith.addf %34, %33 : vector<8x128xf32>
    %36 = arith.divf %34, %35 : vector<8x128xf32>
    %37 = vector.extract_strided_slice %19 {offsets = [0, 256], sizes = [8, 128], strides = [1, 1]} : vector<8x384xf32> to vector<8x128xf32>
    %38 = vector.extract_strided_slice %20 {offsets = [0, 256], sizes = [8, 128], strides = [1, 1]} : vector<8x384xf32> to vector<8x128xf32>
    %39 = arith.addf %38, %14 : vector<8x128xf32>
    %40 = arith.mulf %28, %39 : vector<8x128xf32>
    %41 = arith.addf %37, %40 : vector<8x128xf32>
    %42 = math.tanh %41 : vector<8x128xf32>
    %43 = arith.subf %15, %42 : vector<8x128xf32>
    %44 = arith.mulf %36, %43 : vector<8x128xf32>
    %45 = arith.addf %42, %44 : vector<8x128xf32>
    %c1_i32 = arith.constant 1 : i32
    %c8_i32_20 = arith.constant 8 : i32
    %46 = arith.muli %c1_i32, %c8_i32_20 : i32
    %47 = tpu.assume_multiple %46, 8 : i32
    %48 = arith.index_cast %47 : i32 to index
    %c0_21 = arith.constant 0 : index
    %49 = vector.load %arg10[%48, %c0_21] : memref<64x384xf32, #tpu.memory_space<vmem>>, vector<8x384xf32>
    %cst_22 = arith.constant dense<0.000000e+00> : vector<8x384xf32>
    %50 = tpu.matmul %45, %11, %cst_22 {dimension_numbers = #tpu.dot_dimension_numbers<[1], [0], [0], [1], [0, 0, 1, 1], [], []>} : vector<8x128xf32>, vector<128x384xf32>, vector<8x384xf32> -> vector<8x384xf32>
    %51 = vector.extract_strided_slice %49 {offsets = [0, 0], sizes = [8, 128], strides = [1, 1]} : vector<8x384xf32> to vector<8x128xf32>
    %52 = vector.extract_strided_slice %50 {offsets = [0, 0], sizes = [8, 128], strides = [1, 1]} : vector<8x384xf32> to vector<8x128xf32>
    %53 = arith.addf %51, %52 : vector<8x128xf32>
    %54 = arith.negf %53 : vector<8x128xf32>
    %55 = math.exp %54 : vector<8x128xf32>
    %cst_23 = arith.constant 1.000000e+00 : f32
    %56 = vector.broadcast %cst_23 : f32 to vector<8x128xf32>
    %57 = arith.addf %56, %55 : vector<8x128xf32>
    %58 = arith.divf %56, %57 : vector<8x128xf32>
    %59 = vector.extract_strided_slice %49 {offsets = [0, 128], sizes = [8, 128], strides = [1, 1]} : vector<8x384xf32> to vector<8x128xf32>
    %60 = vector.extract_strided_slice %50 {offsets = [0, 128], sizes = [8, 128], strides = [1, 1]} : vector<8x384xf32> to vector<8x128xf32>
    %61 = arith.addf %59, %60 : vector<8x128xf32>
    %62 = arith.negf %61 : vector<8x128xf32>
    %63 = math.exp %62 : vector<8x128xf32>
    %cst_24 = arith.constant 1.000000e+00 : f32
    %64 = vector.broadcast %cst_24 : f32 to vector<8x128xf32>
    %65 = arith.addf %64, %63 : vector<8x128xf32>
    %66 = arith.divf %64, %65 : vector<8x128xf32>
    %67 = vector.extract_strided_slice %49 {offsets = [0, 256], sizes = [8, 128], strides = [1, 1]} : vector<8x384xf32> to vector<8x128xf32>
    %68 = vector.extract_strided_slice %50 {offsets = [0, 256], sizes = [8, 128], strides = [1, 1]} : vector<8x384xf32> to vector<8x128xf32>
    %69 = arith.addf %68, %14 : vector<8x128xf32>
    %70 = arith.mulf %58, %69 : vector<8x128xf32>
    %71 = arith.addf %67, %70 : vector<8x128xf32>
    %72 = math.tanh %71 : vector<8x128xf32>
    %73 = arith.subf %45, %72 : vector<8x128xf32>
    %74 = arith.mulf %66, %73 : vector<8x128xf32>
    %75 = arith.addf %72, %74 : vector<8x128xf32>
    %c2_i32 = arith.constant 2 : i32
    %c8_i32_25 = arith.constant 8 : i32
    %76 = arith.muli %c2_i32, %c8_i32_25 : i32
    %77 = tpu.assume_multiple %76, 8 : i32
    %78 = arith.index_cast %77 : i32 to index
    %c0_26 = arith.constant 0 : index
    %79 = vector.load %arg10[%78, %c0_26] : memref<64x384xf32, #tpu.memory_space<vmem>>, vector<8x384xf32>
    %cst_27 = arith.constant dense<0.000000e+00> : vector<8x384xf32>
    %80 = tpu.matmul %75, %11, %cst_27 {dimension_numbers = #tpu.dot_dimension_numbers<[1], [0], [0], [1], [0, 0, 1, 1], [], []>} : vector<8x128xf32>, vector<128x384xf32>, vector<8x384xf32> -> vector<8x384xf32>
    %81 = vector.extract_strided_slice %79 {offsets = [0, 0], sizes = [8, 128], strides = [1, 1]} : vector<8x384xf32> to vector<8x128xf32>
    %82 = vector.extract_strided_slice %80 {offsets = [0, 0], sizes = [8, 128], strides = [1, 1]} : vector<8x384xf32> to vector<8x128xf32>
    %83 = arith.addf %81, %82 : vector<8x128xf32>
    %84 = arith.negf %83 : vector<8x128xf32>
    %85 = math.exp %84 : vector<8x128xf32>
    %cst_28 = arith.constant 1.000000e+00 : f32
    %86 = vector.broadcast %cst_28 : f32 to vector<8x128xf32>
    %87 = arith.addf %86, %85 : vector<8x128xf32>
    %88 = arith.divf %86, %87 : vector<8x128xf32>
    %89 = vector.extract_strided_slice %79 {offsets = [0, 128], sizes = [8, 128], strides = [1, 1]} : vector<8x384xf32> to vector<8x128xf32>
    %90 = vector.extract_strided_slice %80 {offsets = [0, 128], sizes = [8, 128], strides = [1, 1]} : vector<8x384xf32> to vector<8x128xf32>
    %91 = arith.addf %89, %90 : vector<8x128xf32>
    %92 = arith.negf %91 : vector<8x128xf32>
    %93 = math.exp %92 : vector<8x128xf32>
    %cst_29 = arith.constant 1.000000e+00 : f32
    %94 = vector.broadcast %cst_29 : f32 to vector<8x128xf32>
    %95 = arith.addf %94, %93 : vector<8x128xf32>
    %96 = arith.divf %94, %95 : vector<8x128xf32>
    %97 = vector.extract_strided_slice %79 {offsets = [0, 256], sizes = [8, 128], strides = [1, 1]} : vector<8x384xf32> to vector<8x128xf32>
    %98 = vector.extract_strided_slice %80 {offsets = [0, 256], sizes = [8, 128], strides = [1, 1]} : vector<8x384xf32> to vector<8x128xf32>
    %99 = arith.addf %98, %14 : vector<8x128xf32>
    %100 = arith.mulf %88, %99 : vector<8x128xf32>
    %101 = arith.addf %97, %100 : vector<8x128xf32>
    %102 = math.tanh %101 : vector<8x128xf32>
    %103 = arith.subf %75, %102 : vector<8x128xf32>
    %104 = arith.mulf %96, %103 : vector<8x128xf32>
    %105 = arith.addf %102, %104 : vector<8x128xf32>
    %c3_i32 = arith.constant 3 : i32
    %c8_i32_30 = arith.constant 8 : i32
    %106 = arith.muli %c3_i32, %c8_i32_30 : i32
    %107 = tpu.assume_multiple %106, 8 : i32
    %108 = arith.index_cast %107 : i32 to index
    %c0_31 = arith.constant 0 : index
    %109 = vector.load %arg10[%108, %c0_31] : memref<64x384xf32, #tpu.memory_space<vmem>>, vector<8x384xf32>
    %cst_32 = arith.constant dense<0.000000e+00> : vector<8x384xf32>
    %110 = tpu.matmul %105, %11, %cst_32 {dimension_numbers = #tpu.dot_dimension_numbers<[1], [0], [0], [1], [0, 0, 1, 1], [], []>} : vector<8x128xf32>, vector<128x384xf32>, vector<8x384xf32> -> vector<8x384xf32>
    %111 = vector.extract_strided_slice %109 {offsets = [0, 0], sizes = [8, 128], strides = [1, 1]} : vector<8x384xf32> to vector<8x128xf32>
    %112 = vector.extract_strided_slice %110 {offsets = [0, 0], sizes = [8, 128], strides = [1, 1]} : vector<8x384xf32> to vector<8x128xf32>
    %113 = arith.addf %111, %112 : vector<8x128xf32>
    %114 = arith.negf %113 : vector<8x128xf32>
    %115 = math.exp %114 : vector<8x128xf32>
    %cst_33 = arith.constant 1.000000e+00 : f32
    %116 = vector.broadcast %cst_33 : f32 to vector<8x128xf32>
    %117 = arith.addf %116, %115 : vector<8x128xf32>
    %118 = arith.divf %116, %117 : vector<8x128xf32>
    %119 = vector.extract_strided_slice %109 {offsets = [0, 128], sizes = [8, 128], strides = [1, 1]} : vector<8x384xf32> to vector<8x128xf32>
    %120 = vector.extract_strided_slice %110 {offsets = [0, 128], sizes = [8, 128], strides = [1, 1]} : vector<8x384xf32> to vector<8x128xf32>
    %121 = arith.addf %119, %120 : vector<8x128xf32>
    %122 = arith.negf %121 : vector<8x128xf32>
    %123 = math.exp %122 : vector<8x128xf32>
    %cst_34 = arith.constant 1.000000e+00 : f32
    %124 = vector.broadcast %cst_34 : f32 to vector<8x128xf32>
    %125 = arith.addf %124, %123 : vector<8x128xf32>
    %126 = arith.divf %124, %125 : vector<8x128xf32>
    %127 = vector.extract_strided_slice %109 {offsets = [0, 256], sizes = [8, 128], strides = [1, 1]} : vector<8x384xf32> to vector<8x128xf32>
    %128 = vector.extract_strided_slice %110 {offsets = [0, 256], sizes = [8, 128], strides = [1, 1]} : vector<8x384xf32> to vector<8x128xf32>
    %129 = arith.addf %128, %14 : vector<8x128xf32>
    %130 = arith.mulf %118, %129 : vector<8x128xf32>
    %131 = arith.addf %127, %130 : vector<8x128xf32>
    %132 = math.tanh %131 : vector<8x128xf32>
    %133 = arith.subf %105, %132 : vector<8x128xf32>
    %134 = arith.mulf %126, %133 : vector<8x128xf32>
    %135 = arith.addf %132, %134 : vector<8x128xf32>
    %c4_i32 = arith.constant 4 : i32
    %c8_i32_35 = arith.constant 8 : i32
    %136 = arith.muli %c4_i32, %c8_i32_35 : i32
    %137 = tpu.assume_multiple %136, 8 : i32
    %138 = arith.index_cast %137 : i32 to index
    %c0_36 = arith.constant 0 : index
    %139 = vector.load %arg10[%138, %c0_36] : memref<64x384xf32, #tpu.memory_space<vmem>>, vector<8x384xf32>
    %cst_37 = arith.constant dense<0.000000e+00> : vector<8x384xf32>
    %140 = tpu.matmul %135, %11, %cst_37 {dimension_numbers = #tpu.dot_dimension_numbers<[1], [0], [0], [1], [0, 0, 1, 1], [], []>} : vector<8x128xf32>, vector<128x384xf32>, vector<8x384xf32> -> vector<8x384xf32>
    %141 = vector.extract_strided_slice %139 {offsets = [0, 0], sizes = [8, 128], strides = [1, 1]} : vector<8x384xf32> to vector<8x128xf32>
    %142 = vector.extract_strided_slice %140 {offsets = [0, 0], sizes = [8, 128], strides = [1, 1]} : vector<8x384xf32> to vector<8x128xf32>
    %143 = arith.addf %141, %142 : vector<8x128xf32>
    %144 = arith.negf %143 : vector<8x128xf32>
    %145 = math.exp %144 : vector<8x128xf32>
    %cst_38 = arith.constant 1.000000e+00 : f32
    %146 = vector.broadcast %cst_38 : f32 to vector<8x128xf32>
    %147 = arith.addf %146, %145 : vector<8x128xf32>
    %148 = arith.divf %146, %147 : vector<8x128xf32>
    %149 = vector.extract_strided_slice %139 {offsets = [0, 128], sizes = [8, 128], strides = [1, 1]} : vector<8x384xf32> to vector<8x128xf32>
    %150 = vector.extract_strided_slice %140 {offsets = [0, 128], sizes = [8, 128], strides = [1, 1]} : vector<8x384xf32> to vector<8x128xf32>
    %151 = arith.addf %149, %150 : vector<8x128xf32>
    %152 = arith.negf %151 : vector<8x128xf32>
    %153 = math.exp %152 : vector<8x128xf32>
    %cst_39 = arith.constant 1.000000e+00 : f32
    %154 = vector.broadcast %cst_39 : f32 to vector<8x128xf32>
    %155 = arith.addf %154, %153 : vector<8x128xf32>
    %156 = arith.divf %154, %155 : vector<8x128xf32>
    %157 = vector.extract_strided_slice %139 {offsets = [0, 256], sizes = [8, 128], strides = [1, 1]} : vector<8x384xf32> to vector<8x128xf32>
    %158 = vector.extract_strided_slice %140 {offsets = [0, 256], sizes = [8, 128], strides = [1, 1]} : vector<8x384xf32> to vector<8x128xf32>
    %159 = arith.addf %158, %14 : vector<8x128xf32>
    %160 = arith.mulf %148, %159 : vector<8x128xf32>
    %161 = arith.addf %157, %160 : vector<8x128xf32>
    %162 = math.tanh %161 : vector<8x128xf32>
    %163 = arith.subf %135, %162 : vector<8x128xf32>
    %164 = arith.mulf %156, %163 : vector<8x128xf32>
    %165 = arith.addf %162, %164 : vector<8x128xf32>
    %c5_i32 = arith.constant 5 : i32
    %c8_i32_40 = arith.constant 8 : i32
    %166 = arith.muli %c5_i32, %c8_i32_40 : i32
    %167 = tpu.assume_multiple %166, 8 : i32
    %168 = arith.index_cast %167 : i32 to index
    %c0_41 = arith.constant 0 : index
    %169 = vector.load %arg10[%168, %c0_41] : memref<64x384xf32, #tpu.memory_space<vmem>>, vector<8x384xf32>
    %cst_42 = arith.constant dense<0.000000e+00> : vector<8x384xf32>
    %170 = tpu.matmul %165, %11, %cst_42 {dimension_numbers = #tpu.dot_dimension_numbers<[1], [0], [0], [1], [0, 0, 1, 1], [], []>} : vector<8x128xf32>, vector<128x384xf32>, vector<8x384xf32> -> vector<8x384xf32>
    %171 = vector.extract_strided_slice %169 {offsets = [0, 0], sizes = [8, 128], strides = [1, 1]} : vector<8x384xf32> to vector<8x128xf32>
    %172 = vector.extract_strided_slice %170 {offsets = [0, 0], sizes = [8, 128], strides = [1, 1]} : vector<8x384xf32> to vector<8x128xf32>
    %173 = arith.addf %171, %172 : vector<8x128xf32>
    %174 = arith.negf %173 : vector<8x128xf32>
    %175 = math.exp %174 : vector<8x128xf32>
    %cst_43 = arith.constant 1.000000e+00 : f32
    %176 = vector.broadcast %cst_43 : f32 to vector<8x128xf32>
    %177 = arith.addf %176, %175 : vector<8x128xf32>
    %178 = arith.divf %176, %177 : vector<8x128xf32>
    %179 = vector.extract_strided_slice %169 {offsets = [0, 128], sizes = [8, 128], strides = [1, 1]} : vector<8x384xf32> to vector<8x128xf32>
    %180 = vector.extract_strided_slice %170 {offsets = [0, 128], sizes = [8, 128], strides = [1, 1]} : vector<8x384xf32> to vector<8x128xf32>
    %181 = arith.addf %179, %180 : vector<8x128xf32>
    %182 = arith.negf %181 : vector<8x128xf32>
    %183 = math.exp %182 : vector<8x128xf32>
    %cst_44 = arith.constant 1.000000e+00 : f32
    %184 = vector.broadcast %cst_44 : f32 to vector<8x128xf32>
    %185 = arith.addf %184, %183 : vector<8x128xf32>
    %186 = arith.divf %184, %185 : vector<8x128xf32>
    %187 = vector.extract_strided_slice %169 {offsets = [0, 256], sizes = [8, 128], strides = [1, 1]} : vector<8x384xf32> to vector<8x128xf32>
    %188 = vector.extract_strided_slice %170 {offsets = [0, 256], sizes = [8, 128], strides = [1, 1]} : vector<8x384xf32> to vector<8x128xf32>
    %189 = arith.addf %188, %14 : vector<8x128xf32>
    %190 = arith.mulf %178, %189 : vector<8x128xf32>
    %191 = arith.addf %187, %190 : vector<8x128xf32>
    %192 = math.tanh %191 : vector<8x128xf32>
    %193 = arith.subf %165, %192 : vector<8x128xf32>
    %194 = arith.mulf %186, %193 : vector<8x128xf32>
    %195 = arith.addf %192, %194 : vector<8x128xf32>
    %c6_i32 = arith.constant 6 : i32
    %c8_i32_45 = arith.constant 8 : i32
    %196 = arith.muli %c6_i32, %c8_i32_45 : i32
    %197 = tpu.assume_multiple %196, 8 : i32
    %198 = arith.index_cast %197 : i32 to index
    %c0_46 = arith.constant 0 : index
    %199 = vector.load %arg10[%198, %c0_46] : memref<64x384xf32, #tpu.memory_space<vmem>>, vector<8x384xf32>
    %cst_47 = arith.constant dense<0.000000e+00> : vector<8x384xf32>
    %200 = tpu.matmul %195, %11, %cst_47 {dimension_numbers = #tpu.dot_dimension_numbers<[1], [0], [0], [1], [0, 0, 1, 1], [], []>} : vector<8x128xf32>, vector<128x384xf32>, vector<8x384xf32> -> vector<8x384xf32>
    %201 = vector.extract_strided_slice %199 {offsets = [0, 0], sizes = [8, 128], strides = [1, 1]} : vector<8x384xf32> to vector<8x128xf32>
    %202 = vector.extract_strided_slice %200 {offsets = [0, 0], sizes = [8, 128], strides = [1, 1]} : vector<8x384xf32> to vector<8x128xf32>
    %203 = arith.addf %201, %202 : vector<8x128xf32>
    %204 = arith.negf %203 : vector<8x128xf32>
    %205 = math.exp %204 : vector<8x128xf32>
    %cst_48 = arith.constant 1.000000e+00 : f32
    %206 = vector.broadcast %cst_48 : f32 to vector<8x128xf32>
    %207 = arith.addf %206, %205 : vector<8x128xf32>
    %208 = arith.divf %206, %207 : vector<8x128xf32>
    %209 = vector.extract_strided_slice %199 {offsets = [0, 128], sizes = [8, 128], strides = [1, 1]} : vector<8x384xf32> to vector<8x128xf32>
    %210 = vector.extract_strided_slice %200 {offsets = [0, 128], sizes = [8, 128], strides = [1, 1]} : vector<8x384xf32> to vector<8x128xf32>
    %211 = arith.addf %209, %210 : vector<8x128xf32>
    %212 = arith.negf %211 : vector<8x128xf32>
    %213 = math.exp %212 : vector<8x128xf32>
    %cst_49 = arith.constant 1.000000e+00 : f32
    %214 = vector.broadcast %cst_49 : f32 to vector<8x128xf32>
    %215 = arith.addf %214, %213 : vector<8x128xf32>
    %216 = arith.divf %214, %215 : vector<8x128xf32>
    %217 = vector.extract_strided_slice %199 {offsets = [0, 256], sizes = [8, 128], strides = [1, 1]} : vector<8x384xf32> to vector<8x128xf32>
    %218 = vector.extract_strided_slice %200 {offsets = [0, 256], sizes = [8, 128], strides = [1, 1]} : vector<8x384xf32> to vector<8x128xf32>
    %219 = arith.addf %218, %14 : vector<8x128xf32>
    %220 = arith.mulf %208, %219 : vector<8x128xf32>
    %221 = arith.addf %217, %220 : vector<8x128xf32>
    %222 = math.tanh %221 : vector<8x128xf32>
    %223 = arith.subf %195, %222 : vector<8x128xf32>
    %224 = arith.mulf %216, %223 : vector<8x128xf32>
    %225 = arith.addf %222, %224 : vector<8x128xf32>
    %c7_i32 = arith.constant 7 : i32
    %c8_i32_50 = arith.constant 8 : i32
    %226 = arith.muli %c7_i32, %c8_i32_50 : i32
    %227 = tpu.assume_multiple %226, 8 : i32
    %228 = arith.index_cast %227 : i32 to index
    %c0_51 = arith.constant 0 : index
    %229 = vector.load %arg10[%228, %c0_51] : memref<64x384xf32, #tpu.memory_space<vmem>>, vector<8x384xf32>
    %cst_52 = arith.constant dense<0.000000e+00> : vector<8x384xf32>
    %230 = tpu.matmul %225, %11, %cst_52 {dimension_numbers = #tpu.dot_dimension_numbers<[1], [0], [0], [1], [0, 0, 1, 1], [], []>} : vector<8x128xf32>, vector<128x384xf32>, vector<8x384xf32> -> vector<8x384xf32>
    %231 = vector.extract_strided_slice %229 {offsets = [0, 0], sizes = [8, 128], strides = [1, 1]} : vector<8x384xf32> to vector<8x128xf32>
    %232 = vector.extract_strided_slice %230 {offsets = [0, 0], sizes = [8, 128], strides = [1, 1]} : vector<8x384xf32> to vector<8x128xf32>
    %233 = arith.addf %231, %232 : vector<8x128xf32>
    %234 = arith.negf %233 : vector<8x128xf32>
    %235 = math.exp %234 : vector<8x128xf32>
    %cst_53 = arith.constant 1.000000e+00 : f32
    %236 = vector.broadcast %cst_53 : f32 to vector<8x128xf32>
    %237 = arith.addf %236, %235 : vector<8x128xf32>
    %238 = arith.divf %236, %237 : vector<8x128xf32>
    %239 = vector.extract_strided_slice %229 {offsets = [0, 128], sizes = [8, 128], strides = [1, 1]} : vector<8x384xf32> to vector<8x128xf32>
    %240 = vector.extract_strided_slice %230 {offsets = [0, 128], sizes = [8, 128], strides = [1, 1]} : vector<8x384xf32> to vector<8x128xf32>
    %241 = arith.addf %239, %240 : vector<8x128xf32>
    %242 = arith.negf %241 : vector<8x128xf32>
    %243 = math.exp %242 : vector<8x128xf32>
    %cst_54 = arith.constant 1.000000e+00 : f32
    %244 = vector.broadcast %cst_54 : f32 to vector<8x128xf32>
    %245 = arith.addf %244, %243 : vector<8x128xf32>
    %246 = arith.divf %244, %245 : vector<8x128xf32>
    %247 = vector.extract_strided_slice %229 {offsets = [0, 256], sizes = [8, 128], strides = [1, 1]} : vector<8x384xf32> to vector<8x128xf32>
    %248 = vector.extract_strided_slice %230 {offsets = [0, 256], sizes = [8, 128], strides = [1, 1]} : vector<8x384xf32> to vector<8x128xf32>
    %249 = arith.addf %248, %14 : vector<8x128xf32>
    %250 = arith.mulf %238, %249 : vector<8x128xf32>
    %251 = arith.addf %247, %250 : vector<8x128xf32>
    %252 = math.tanh %251 : vector<8x128xf32>
    %253 = arith.subf %225, %252 : vector<8x128xf32>
    %254 = arith.mulf %246, %253 : vector<8x128xf32>
    %255 = arith.addf %252, %254 : vector<8x128xf32>
    %c8_i32_55 = arith.constant 8 : i32
    %c0_56 = arith.constant 0 : index
    %c0_57 = arith.constant 0 : index
    %256 = vector.load %arg11[%c0_56, %c0_57] : memref<8x128xf32, #tpu.memory_space<vmem>>, vector<8x128xf32>
    tpu.vector_store %arg11[%c0_56, %c0_57], %255 {strides = array<i32>} : memref<8x128xf32, #tpu.memory_space<vmem>>, vector<8x128xf32>,
    %c0_i32_58 = arith.constant 0 : i32
    %257 = arith.cmpi eq, %arg1, %c0_i32_58 : i32
    %258 = arith.extui %257 : i1 to i32
    %c0_i32_59 = arith.constant 0 : i32
    %259 = arith.cmpi ne, %258, %c0_i32_59 : i32
    scf.if %259 {
      %c0_60 = arith.constant 0 : index
      %c0_61 = arith.constant 0 : index
      %260 = vector.load %arg7[%c0_60, %c0_61] : memref<128x128xf32, #tpu.memory_space<vmem>>, vector<128x128xf32>
      %cst_62 = arith.constant dense<0.000000e+00> : vector<8x128xf32>
      %261 = tpu.matmul %255, %260, %cst_62 {dimension_numbers = #tpu.dot_dimension_numbers<[1], [0], [0], [1], [0, 0, 1, 1], [], []>} : vector<8x128xf32>, vector<128x128xf32>, vector<8x128xf32> -> vector<8x128xf32>
      %c0_63 = arith.constant 0 : index
      %c0_64 = arith.constant 0 : index
      %262 = vector.load %arg8[%c0_63, %c0_64] : memref<1x128xf32, #tpu.memory_space<vmem>>, vector<1x128xf32>
      %263 = vector.broadcast %262 : vector<1x128xf32> to vector<8x128xf32>
      %264 = arith.addf %261, %263 : vector<8x128xf32>
      %265 = arith.negf %264 : vector<8x128xf32>
      %266 = math.exp %265 : vector<8x128xf32>
      %cst_65 = arith.constant 1.000000e+00 : f32
      %267 = vector.broadcast %cst_65 : f32 to vector<8x128xf32>
      %268 = arith.addf %267, %266 : vector<8x128xf32>
      %269 = arith.divf %267, %268 : vector<8x128xf32>
      %c0_66 = arith.constant 0 : index
      %c0_67 = arith.constant 0 : index
      %270 = vector.load %arg9[%c0_66, %c0_67] : memref<8x128xf32, #tpu.memory_space<vmem>>, vector<8x128xf32>
      tpu.vector_store %arg9[%c0_66, %c0_67], %269 {strides = array<i32>} : memref<8x128xf32, #tpu.memory_space<vmem>>, vector<8x128xf32>,
    } else {
    }
    return
  }
  func.func @transform_0(%arg0: i32, %arg1: i32) -> (i32, i32, i32) {
    %c0_i32 = arith.constant 0 : i32
    %c0_i32_0 = arith.constant 0 : i32
    return %arg1, %arg0, %c0_i32 : i32, i32, i32
  }
  func.func @transform_1(%arg0: i32, %arg1: i32) -> (i32, i32) {
    %c0_i32 = arith.constant 0 : i32
    %c0_i32_0 = arith.constant 0 : i32
    %c0_i32_1 = arith.constant 0 : i32
    return %c0_i32, %c0_i32_0 : i32, i32
  }
  func.func @transform_2(%arg0: i32, %arg1: i32) -> (i32, i32) {
    %c0_i32 = arith.constant 0 : i32
    %c0_i32_0 = arith.constant 0 : i32
    %c0_i32_1 = arith.constant 0 : i32
    return %c0_i32, %c0_i32_0 : i32, i32
  }
  func.func @transform_3(%arg0: i32, %arg1: i32) -> (i32, i32) {
    %c0_i32 = arith.constant 0 : i32
    %c0_i32_0 = arith.constant 0 : i32
    %c0_i32_1 = arith.constant 0 : i32
    return %c0_i32, %c0_i32_0 : i32, i32
  }
  func.func @transform_4(%arg0: i32, %arg1: i32) -> (i32, i32) {
    %c0_i32 = arith.constant 0 : i32
    %c0_i32_0 = arith.constant 0 : i32
    %c0_i32_1 = arith.constant 0 : i32
    return %c0_i32, %c0_i32_0 : i32, i32
  }
  func.func @transform_5(%arg0: i32, %arg1: i32) -> (i32, i32) {
    %c0_i32 = arith.constant 0 : i32
    %c0_i32_0 = arith.constant 0 : i32
    %c0_i32_1 = arith.constant 0 : i32
    return %c0_i32, %c0_i32_0 : i32, i32
  }
  func.func @transform_6(%arg0: i32, %arg1: i32) -> (i32, i32) {
    %c0_i32 = arith.constant 0 : i32
    %c0_i32_0 = arith.constant 0 : i32
    %c0_i32_1 = arith.constant 0 : i32
    return %c0_i32, %c0_i32_0 : i32, i32
  }
  func.func @transform_7(%arg0: i32, %arg1: i32) -> (i32, i32) {
    %c0_i32 = arith.constant 0 : i32
    %c0_i32_0 = arith.constant 0 : i32
    return %arg0, %c0_i32 : i32, i32
  }
}

</mosaic_0001>

<llo_original>
// kernel: tpu_custom_call.1
$region0: #{tpu_custom_call.1}
  #allocation0 [shape = 'u32[]', space=smem, size = 0x4, offset = 0x4, fixed_abs, tag = 'smem constant byte address 0x4 - core index']
  #allocation1 [shape = 'u32[144,128]{1,0:T(1,128)}', space=vmem, size = 0x12000, scoped, tag = 'internal scratch']
  #allocation2 [shape = 'f32[64,384]{1,0:T(8,128)}', space=vmem, size = 0x18000, scoped, tag = 'scratch operand']
  #allocation3 [shape = 'f32[8,128]{1,0:T(8,128)}', space=vmem, size = 0x1000, scoped, tag = 'scratch operand']
  %s0 = inlined_call_operand.hbm [shape: f32[8,8,128], index: 0, kind: input, shape index: {}]
  %s1 = inlined_call_operand.hbm [shape: f32[128,384], index: 1, kind: input, shape index: {}]
  %s2 = inlined_call_operand.vmem [shape: f32[1,384], index: 2, kind: input, shape index: {}]
  %s3 = inlined_call_operand.hbm [shape: f32[128,384], index: 3, kind: input, shape index: {}]
  %s4 = inlined_call_operand.vmem [shape: f32[1,128], index: 4, kind: input, shape index: {}]
  %s5 = inlined_call_operand.hbm [shape: f32[128,128], index: 5, kind: input, shape index: {}]
  %s6 = inlined_call_operand.vmem [shape: f32[1,128], index: 6, kind: input, shape index: {}]
  %s7 = inlined_call_operand.hbm [shape: f32[8,128], index: 7, kind: output, shape index: {}]
  %s8 = sld [smem:[#allocation0]]
  $region62: #{tpu_custom_call.1} parent=0
    _
  %s10 = ssub.s32 1, %s8
  %s11 = scalar_select 0, %s10, %s8
  $region1: #{tpu_custom_call.1} parent=0
    #allocation4 [shape = 'u8[32768]{0}', space=vmem, size = 0x8000, scoped, tag = 'input window, operand 0, single buffered']
    #allocation5 [shape = 's32[1]{0}', space=sflag, size = 0x4, scoped, tag = 'scoped memory for tpu_custom_call.1']
    #allocation6 [shape = 's32[1]{0}', space=sflag, size = 0x4, scoped, tag = 'scoped memory for tpu_custom_call.1']
    #allocation7 [shape = 'u8[196608]{0}', space=vmem, size = 0x30000, scoped, tag = 'input window, operand 1, single buffered']
    #allocation8 [shape = 's32[1]{0}', space=sflag, size = 0x4, scoped, tag = 'scoped memory for tpu_custom_call.1']
    #allocation9 [shape = 'u8[196608]{0}', space=vmem, size = 0x30000, scoped, tag = 'input window, operand 3, single buffered']
    #allocation10 [shape = 'u8[65536]{0}', space=vmem, size = 0x10000, scoped, tag = 'input window, operand 5, single buffered']
    #allocation11 [shape = 's32[1]{0}', space=sflag, size = 0x4, scoped, tag = 'scoped memory for tpu_custom_call.1']
    #allocation12 [shape = 'u8[4096]{0}', space=vmem, size = 0x1000, scoped, tag = 'output window, operand 0, single buffered']
    %12 = vsyncpa [#allocation5], 0
    %13 = vsyncpa [#allocation8], 0
    %14 = vsyncpa [#allocation11], 0
    %15 = vsyncpa [#allocation6], 0
    // Predicated region
    $region2: #{tpu_custom_call.1} parent=1 // pred_check
      _
    $region3: #{tpu_custom_call.1} parent=1 // pred_check_branch
      %17 = sbr.rel (0) target = $region5
    $region4: #{tpu_custom_call.1} parent=1 // pred_region
      %s19 = ssub.s32 1024, 1024
      %20 = vsyncadd [#allocation5], %s19
      %s21 = sshll.u32 [#allocation4], 4
      %s22 = int_to_ptr.vmem [resolvable:$true] %s21
      %27 = dma.hbm_to_vmem [thread:$0]  %s0, 1024, %s22, [#allocation5], 128, 128, 8
    $region5: #{tpu_custom_call.1} parent=1 // pred_fallthru
      _
    // Predicated region
    $region6: #{tpu_custom_call.1} parent=1 // pred_check
      _
    $region7: #{tpu_custom_call.1} parent=1 // pred_check_branch
      %29 = sbr.rel (0) target = $region9
    $region8: #{tpu_custom_call.1} parent=1 // pred_region
      %s31 = ssub.s32 6144, 6144
      %32 = vsyncadd [#allocation8], %s31
      %s33 = sshll.u32 [#allocation7], 4
      %s34 = int_to_ptr.vmem [resolvable:$true] %s33
      %39 = dma.hbm_to_vmem [thread:$0]  %s1, 6144, %s34, [#allocation8], 384, 384, 24
    $region9: #{tpu_custom_call.1} parent=1 // pred_fallthru
      _
    // Predicated region
    $region10: #{tpu_custom_call.1} parent=1 // pred_check
      _
    $region11: #{tpu_custom_call.1} parent=1 // pred_check_branch
      %41 = sbr.rel (0) target = $region13
    $region12: #{tpu_custom_call.1} parent=1 // pred_region
      _
    $region13: #{tpu_custom_call.1} parent=1 // pred_fallthru
      _
    // Predicated region
    $region14: #{tpu_custom_call.1} parent=1 // pred_check
      _
    $region15: #{tpu_custom_call.1} parent=1 // pred_check_branch
      %43 = sbr.rel (0) target = $region17
    $region16: #{tpu_custom_call.1} parent=1 // pred_region
      %s45 = ssub.s32 6144, 6144
      %46 = vsyncadd [#allocation8], %s45
      %s47 = sshll.u32 [#allocation9], 4
      %s48 = int_to_ptr.vmem [resolvable:$true] %s47
      %53 = dma.hbm_to_vmem [thread:$0]  %s3, 6144, %s48, [#allocation8], 384, 384, 24
    $region17: #{tpu_custom_call.1} parent=1 // pred_fallthru
      _
    // Predicated region
    $region18: #{tpu_custom_call.1} parent=1 // pred_check
      _
    $region19: #{tpu_custom_call.1} parent=1 // pred_check_branch
      %55 = sbr.rel (0) target = $region21
    $region20: #{tpu_custom_call.1} parent=1 // pred_region
      _
    $region21: #{tpu_custom_call.1} parent=1 // pred_fallthru
      _
    // Predicated region
    $region22: #{tpu_custom_call.1} parent=1 // pred_check
      _
    $region23: #{tpu_custom_call.1} parent=1 // pred_check_branch
      %57 = sbr.rel (0) target = $region25
    $region24: #{tpu_custom_call.1} parent=1 // pred_region
      %s59 = ssub.s32 2048, 2048
      %60 = vsyncadd [#allocation11], %s59
      %s61 = sshll.u32 [#allocation10], 4
      %s62 = int_to_ptr.vmem [resolvable:$true] %s61
      %67 = dma.hbm_to_vmem [thread:$0]  %s5, 2048, %s62, [#allocation11], 128, 128, 8
    $region25: #{tpu_custom_call.1} parent=1 // pred_fallthru
      _
    // Predicated region
    $region26: #{tpu_custom_call.1} parent=1 // pred_check
      _
    $region27: #{tpu_custom_call.1} parent=1 // pred_check_branch
      %69 = sbr.rel (0) target = $region29
    $region28: #{tpu_custom_call.1} parent=1 // pred_region
      _
    $region29: #{tpu_custom_call.1} parent=1 // pred_fallthru
      _
    // Predicated region
    $region30: #{tpu_custom_call.1} parent=1 // pred_check
      _
    $region31: #{tpu_custom_call.1} parent=1 // pred_check_branch
      %71 = sbr.rel (0) target = $region33
    $region32: #{tpu_custom_call.1} parent=1 // pred_region
      %72 = dma.done [#allocation5], 1024
    $region33: #{tpu_custom_call.1} parent=1 // pred_fallthru
      _
    // Predicated region
    $region34: #{tpu_custom_call.1} parent=1 // pred_check
      _
    $region35: #{tpu_custom_call.1} parent=1 // pred_check_branch
      %74 = sbr.rel (0) target = $region37
    $region36: #{tpu_custom_call.1} parent=1 // pred_region
      %75 = dma.done [#allocation8], 6144
    $region37: #{tpu_custom_call.1} parent=1 // pred_fallthru
      _
    // Predicated region
    $region38: #{tpu_custom_call.1} parent=1 // pred_check
      _
    $region39: #{tpu_custom_call.1} parent=1 // pred_check_branch
      %77 = sbr.rel (0) target = $region41
    $region40: #{tpu_custom_call.1} parent=1 // pred_region
      %78 = dma.done [#allocation8], 6144
    $region41: #{tpu_custom_call.1} parent=1 // pred_fallthru
      _
    // Predicated region
    $region42: #{tpu_custom_call.1} parent=1 // pred_check
      _
    $region43: #{tpu_custom_call.1} parent=1 // pred_check_branch
      %80 = sbr.rel (0) target = $region45
    $region44: #{tpu_custom_call.1} parent=1 // pred_region
      %81 = dma.done [#allocation11], 2048
    $region45: #{tpu_custom_call.1} parent=1 // pred_fallthru
      _
    %p82 = scmp.eq.s32.totalorder 0, 0
    // Predicated region
    $region46: #{tpu_custom_call.1} parent=1 // pred_check
      %p83 = pneg %p82
    $region47: #{tpu_custom_call.1} parent=1 // pred_check_branch
      %85 = sbr.rel (%p83) target = $region49
    $region48: #{tpu_custom_call.1} parent=1 // pred_region
      %86 = vst [vmem:[#allocation3] sm:$0xff] 0.0
    $region49: #{tpu_custom_call.1} parent=1 // pred_fallthru
      _
    %v87 = vld [vmem:[#allocation4] sm:$0xff]
    %v88 = vld [vmem:[#allocation4 + $0x8] sm:$0xff]
    %v89 = vld [vmem:[#allocation4 + $0x10] sm:$0xff]
    %v90 = vld [vmem:[#allocation4 + $0x18] sm:$0xff]
    %v91 = vld [vmem:[#allocation4 + $0x20] sm:$0xff]
    %v92 = vld [vmem:[#allocation4 + $0x28] sm:$0xff]
    %v93 = vld [vmem:[#allocation4 + $0x30] sm:$0xff]
    %v94 = vld [vmem:[#allocation4 + $0x38] sm:$0xff]
    %v95 = vld [vmem:[#allocation7] sm:$0xff]
    %v96 = vld [vmem:[#allocation7 + $0x8] sm:$0xff]
    %v97 = vld [vmem:[#allocation7 + $0x10] sm:$0xff]
    %v98 = vld [vmem:[#allocation7 + $0x18] sm:$0xff]
    %v99 = vld [vmem:[#allocation7 + $0x20] sm:$0xff]
    %v100 = vld [vmem:[#allocation7 + $0x28] sm:$0xff]
    %v101 = vld [vmem:[#allocation7 + $0x30] sm:$0xff]
    %v102 = vld [vmem:[#allocation7 + $0x38] sm:$0xff]
    %v103 = vld [vmem:[#allocation7 + $0x40] sm:$0xff]
    %v104 = vld [vmem:[#allocation7 + $0x48] sm:$0xff]
    %v105 = vld [vmem:[#allocation7 + $0x50] sm:$0xff]
    %v106 = vld [vmem:[#allocation7 + $0x58] sm:$0xff]
    %v107 = vld [vmem:[#allocation7 + $0x60] sm:$0xff]
    %v108 = vld [vmem:[#allocation7 + $0x68] sm:$0xff]
    %v109 = vld [vmem:[#allocation7 + $0x70] sm:$0xff]
    %v110 = vld [vmem:[#allocation7 + $0x78] sm:$0xff]
    %v111 = vld [vmem:[#allocation7 + $0x80] sm:$0xff]
    %v112 = vld [vmem:[#allocation7 + $0x88] sm:$0xff]
    %v113 = vld [vmem:[#allocation7 + $0x90] sm:$0xff]
    %v114 = vld [vmem:[#allocation7 + $0x98] sm:$0xff]
    %v115 = vld [vmem:[#allocation7 + $0xa0] sm:$0xff]
    %v116 = vld [vmem:[#allocation7 + $0xa8] sm:$0xff]
    %v117 = vld [vmem:[#allocation7 + $0xb0] sm:$0xff]
    %v118 = vld [vmem:[#allocation7 + $0xb8] sm:$0xff]
    %v119 = vld [vmem:[#allocation7 + $0xc0] sm:$0xff]
    %v120 = vld [vmem:[#allocation7 + $0xc8] sm:$0xff]
    %v121 = vld [vmem:[#allocation7 + $0xd0] sm:$0xff]
    %v122 = vld [vmem:[#allocation7 + $0xd8] sm:$0xff]
    %v123 = vld [vmem:[#allocation7 + $0xe0] sm:$0xff]
    %v124 = vld [vmem:[#allocation7 + $0xe8] sm:$0xff]
    %v125 = vld [vmem:[#allocation7 + $0xf0] sm:$0xff]
    %v126 = vld [vmem:[#allocation7 + $0xf8] sm:$0xff]
    %v127 = vld [vmem:[#allocation7 + $0x100] sm:$0xff]
    %v128 = vld [vmem:[#allocation7 + $0x108] sm:$0xff]
    %v129 = vld [vmem:[#allocation7 + $0x110] sm:$0xff]
    %v130 = vld [vmem:[#allocation7 + $0x118] sm:$0xff]
    %v131 = vld [vmem:[#allocation7 + $0x120] sm:$0xff]
    %v132 = vld [vmem:[#allocation7 + $0x128] sm:$0xff]
    %v133 = vld [vmem:[#allocation7 + $0x130] sm:$0xff]
    %v134 = vld [vmem:[#allocation7 + $0x138] sm:$0xff]
    %v135 = vld [vmem:[#allocation7 + $0x140] sm:$0xff]
    %v136 = vld [vmem:[#allocation7 + $0x148] sm:$0xff]
    %v137 = vld [vmem:[#allocation7 + $0x150] sm:$0xff]
    %v138 = vld [vmem:[#allocation7 + $0x158] sm:$0xff]
    %v139 = vld [vmem:[#allocation7 + $0x160] sm:$0xff]
    %v140 = vld [vmem:[#allocation7 + $0x168] sm:$0xff]
    %v141 = vld [vmem:[#allocation7 + $0x170] sm:$0xff]
    %v142 = vld [vmem:[#allocation7 + $0x178] sm:$0xff]
    %v143 = vld [vmem:[%s2] sm:$0x7]
    %v145 = vlaneseq
    %v146 = vshrl.u32 %v145, 7
    %v147 = vsub.s32 0, %v146
    %v148 = vrot.slane %v143, %v147
    %v149 = vlaneseq
    %v150 = vshrl.u32 %v149, 7
    %v151 = vsub.s32 1, %v150
    %v152 = vrot.slane %v143, %v151
    %v153 = vlaneseq
    %v154 = vshrl.u32 %v153, 7
    %v155 = vsub.s32 2, %v154
    %v156 = vrot.slane %v143, %v155
    %160 = vmatprep.subr.mxu0 %v96
    %161 = vmatpush1.msra.mxu0 %v95
    %162 = vmatprep.subr.mxu0 %v99
    %163 = vmatpush1.msra.mxu0 %v98
    %164 = vmatprep.subr.mxu0 %v102
    %165 = vmatpush1.msra.mxu0 %v101
    %166 = vmatprep.subr.mxu0 %v105
    %167 = vmatpush1.msra.mxu0 %v104
    %168 = vmatprep.subr.mxu0 %v108
    %169 = vmatpush1.msra.mxu0 %v107
    %170 = vmatprep.subr.mxu0 %v111
    %171 = vmatpush1.msra.mxu0 %v110
    %172 = vmatprep.subr.mxu0 %v114
    %173 = vmatpush1.msra.mxu0 %v113
    %174 = vmatprep.subr.mxu0 %v117
    %175 = vmatpush1.msra.mxu0 %v116
    %176 = vmatprep.subr.mxu0 %v120
    %177 = vmatpush1.msra.mxu0 %v119
    %178 = vmatprep.subr.mxu0 %v123
    %179 = vmatpush1.msra.mxu0 %v122
    %180 = vmatprep.subr.mxu0 %v126
    %181 = vmatpush1.msra.mxu0 %v125
    %182 = vmatprep.subr.mxu0 %v129
    %183 = vmatpush1.msra.mxu0 %v128
    %184 = vmatprep.subr.mxu0 %v132
    %185 = vmatpush1.msra.mxu0 %v131
    %186 = vmatprep.subr.mxu0 %v135
    %187 = vmatpush1.msra.mxu0 %v134
    %188 = vmatprep.subr.mxu0 %v138
    %189 = vmatpush1.msra.mxu0 %v137
    %190 = vmatprep.subr.mxu0 %v141
    %191 = vmatpush1.msra.mxu0 %v140
    %192 = vmatprep.subr.mxu0 0.0
    %193 = vmatpush1.msra.mxu0 0.0
    %194 = vmatprep.subr.mxu0 0.0
    %195 = vmatpush1.msra.mxu0 0.0
    %196 = vmatprep.subr.mxu0 0.0
    %197 = vmatpush1.msra.mxu0 0.0
    %198 = vmatprep.subr.mxu0 0.0
    %199 = vmatpush1.msra.mxu0 0.0
    %200 = vmatprep.subr.mxu0 0.0
    %201 = vmatpush1.msra.mxu0 0.0
    %202 = vmatprep.subr.mxu0 0.0
    %203 = vmatpush1.msra.mxu0 0.0
    %204 = vmatprep.subr.mxu0 0.0
    %205 = vmatpush1.msra.mxu0 0.0
    %206 = vmatprep.subr.mxu0 0.0
    %207 = vmatpush1.msra.mxu0 0.0
    %208 = vmatprep.subr.mxu0 0.0
    %209 = vmatpush1.msra.mxu0 0.0
    %210 = vmatprep.subr.mxu0 0.0
    %211 = vmatpush1.msra.mxu0 0.0
    %212 = vmatprep.subr.mxu0 0.0
    %213 = vmatpush1.msra.mxu0 0.0
    %214 = vmatprep.subr.mxu0 0.0
    %215 = vmatpush1.msra.mxu0 0.0
    %216 = vmatprep.subr.mxu0 0.0
    %217 = vmatpush1.msra.mxu0 0.0
    %218 = vmatprep.subr.mxu0 0.0
    %219 = vmatpush1.msra.mxu0 0.0
    %220 = vmatprep.subr.mxu0 0.0
    %221 = vmatpush1.msra.mxu0 0.0
    %222 = vmatprep.subr.mxu0 0.0
    %223 = vmatpush1.msra.mxu0 0.0
    %224 = vmatprep.mubr.f32.mxu0 0.0
    %225 = vmatmul.mubr.f32.gmra.mrb[0].mxu0 %v87
    %v226 = vpop.f32.mrb[0].mxu0
    %v227 = vadd.f32 %v148, %v226
    %v228 = vpop.f32.mrb[0].mxu0
    %v229 = vadd.f32 %v152, %v228
    %230 = vmatprep.mubr.f32.mxu0 0.0
    %231 = vmatmul.mubr.f32.gmra.mrb[0].mxu0 %v88
    %v232 = vpop.f32.mrb[0].mxu0
    %v233 = vadd.f32 %v148, %v232
    %v234 = vpop.f32.mrb[0].mxu0
    %v235 = vadd.f32 %v152, %v234
    %236 = vmatprep.mubr.f32.mxu0 0.0
    %237 = vmatmul.mubr.f32.gmra.mrb[0].mxu0 %v89
    %v238 = vpop.f32.mrb[0].mxu0
    %v239 = vadd.f32 %v148, %v238
    %v240 = vpop.f32.mrb[0].mxu0
    %v241 = vadd.f32 %v152, %v240
    %242 = vmatprep.mubr.f32.mxu0 0.0
    %243 = vmatmul.mubr.f32.gmra.mrb[0].mxu0 %v90
    %v244 = vpop.f32.mrb[0].mxu0
    %v245 = vadd.f32 %v148, %v244
    %v246 = vpop.f32.mrb[0].mxu0
    %v247 = vadd.f32 %v152, %v246
    %248 = vmatprep.mubr.f32.mxu0 0.0
    %249 = vmatmul.mubr.f32.gmra.mrb[0].mxu0 %v91
    %v250 = vpop.f32.mrb[0].mxu0
    %v251 = vadd.f32 %v148, %v250
    %v252 = vpop.f32.mrb[0].mxu0
    %v253 = vadd.f32 %v152, %v252
    %254 = vmatprep.mubr.f32.mxu0 0.0
    %255 = vmatmul.mubr.f32.gmra.mrb[0].mxu0 %v92
    %v256 = vpop.f32.mrb[0].mxu0
    %v257 = vadd.f32 %v148, %v256
    %v258 = vpop.f32.mrb[0].mxu0
    %v259 = vadd.f32 %v152, %v258
    %260 = vmatprep.mubr.f32.mxu0 0.0
    %261 = vmatmul.mubr.f32.gmra.mrb[0].mxu0 %v93
    %v262 = vpop.f32.mrb[0].mxu0
    %v263 = vadd.f32 %v148, %v262
    %v264 = vpop.f32.mrb[0].mxu0
    %v265 = vadd.f32 %v152, %v264
    %266 = vmatprep.mubr.f32.mxu0 0.0
    %267 = vmatmul.mubr.f32.gmra.mrb[0].mxu0 %v94
    %v268 = vpop.f32.mrb[0].mxu0
    %v269 = vadd.f32 %v148, %v268
    %v270 = vpop.f32.mrb[0].mxu0
    %v271 = vadd.f32 %v152, %v270
    %272 = vdwg.mxu0
    %273 = vmatprep.subr.mxu0 0.0
    %274 = vmatpush1.msra.mxu0 %v97
    %275 = vmatprep.subr.mxu0 0.0
    %276 = vmatpush1.msra.mxu0 %v100
    %277 = vmatprep.subr.mxu0 0.0
    %278 = vmatpush1.msra.mxu0 %v103
    %279 = vmatprep.subr.mxu0 0.0
    %280 = vmatpush1.msra.mxu0 %v106
    %281 = vmatprep.subr.mxu0 0.0
    %282 = vmatpush1.msra.mxu0 %v109
    %283 = vmatprep.subr.mxu0 0.0
    %284 = vmatpush1.msra.mxu0 %v112
    %285 = vmatprep.subr.mxu0 0.0
    %286 = vmatpush1.msra.mxu0 %v115
    %287 = vmatprep.subr.mxu0 0.0
    %288 = vmatpush1.msra.mxu0 %v118
    %289 = vmatprep.subr.mxu0 0.0
    %290 = vmatpush1.msra.mxu0 %v121
    %291 = vmatprep.subr.mxu0 0.0
    %292 = vmatpush1.msra.mxu0 %v124
    %293 = vmatprep.subr.mxu0 0.0
    %294 = vmatpush1.msra.mxu0 %v127
    %295 = vmatprep.subr.mxu0 0.0
    %296 = vmatpush1.msra.mxu0 %v130
    %297 = vmatprep.subr.mxu0 0.0
    %298 = vmatpush1.msra.mxu0 %v133
    %299 = vmatprep.subr.mxu0 0.0
    %300 = vmatpush1.msra.mxu0 %v136
    %301 = vmatprep.subr.mxu0 0.0
    %302 = vmatpush1.msra.mxu0 %v139
    %303 = vmatprep.subr.mxu0 0.0
    %304 = vmatpush1.msra.mxu0 %v142
    %305 = vmatprep.subr.mxu0 0.0
    %306 = vmatpush1.msra.mxu0 0.0
    %307 = vmatprep.subr.mxu0 0.0
    %308 = vmatpush1.msra.mxu0 0.0
    %309 = vmatprep.subr.mxu0 0.0
    %310 = vmatpush1.msra.mxu0 0.0
    %311 = vmatprep.subr.mxu0 0.0
    %312 = vmatpush1.msra.mxu0 0.0
    %313 = vmatprep.subr.mxu0 0.0
    %314 = vmatpush1.msra.mxu0 0.0
    %315 = vmatprep.subr.mxu0 0.0
    %316 = vmatpush1.msra.mxu0 0.0
    %317 = vmatprep.subr.mxu0 0.0
    %318 = vmatpush1.msra.mxu0 0.0
    %319 = vmatprep.subr.mxu0 0.0
    %320 = vmatpush1.msra.mxu0 0.0
    %321 = vmatprep.subr.mxu0 0.0
    %322 = vmatpush1.msra.mxu0 0.0
    %323 = vmatprep.subr.mxu0 0.0
    %324 = vmatpush1.msra.mxu0 0.0
    %325 = vmatprep.subr.mxu0 0.0
    %326 = vmatpush1.msra.mxu0 0.0
    %327 = vmatprep.subr.mxu0 0.0
    %328 = vmatpush1.msra.mxu0 0.0
    %329 = vmatprep.subr.mxu0 0.0
    %330 = vmatpush1.msra.mxu0 0.0
    %331 = vmatprep.subr.mxu0 0.0
    %332 = vmatpush1.msra.mxu0 0.0
    %333 = vmatprep.subr.mxu0 0.0
    %334 = vmatpush1.msra.mxu0 0.0
    %335 = vmatprep.subr.mxu0 0.0
    %336 = vmatpush1.msra.mxu0 0.0
    %337 = vmatprep.mubr.f32.mxu0 0.0
    %338 = vmatmul.mubr.f32.gmra.mrb[0].mxu0 %v87
    %v339 = vpop.f32.mrb[0].mxu0
    %v340 = vadd.f32 %v156, %v339
    %v341 = vpop.f32.mrb[0].mxu0
    %342 = vmatprep.mubr.f32.mxu0 0.0
    %343 = vmatmul.mubr.f32.gmra.mrb[0].mxu0 %v88
    %v344 = vpop.f32.mrb[0].mxu0
    %v345 = vadd.f32 %v156, %v344
    %v346 = vpop.f32.mrb[0].mxu0
    %347 = vmatprep.mubr.f32.mxu0 0.0
    %348 = vmatmul.mubr.f32.gmra.mrb[0].mxu0 %v89
    %v349 = vpop.f32.mrb[0].mxu0
    %v350 = vadd.f32 %v156, %v349
    %v351 = vpop.f32.mrb[0].mxu0
    %352 = vmatprep.mubr.f32.mxu0 0.0
    %353 = vmatmul.mubr.f32.gmra.mrb[0].mxu0 %v90
    %v354 = vpop.f32.mrb[0].mxu0
    %v355 = vadd.f32 %v156, %v354
    %v356 = vpop.f32.mrb[0].mxu0
    %357 = vmatprep.mubr.f32.mxu0 0.0
    %358 = vmatmul.mubr.f32.gmra.mrb[0].mxu0 %v91
    %v359 = vpop.f32.mrb[0].mxu0
    %v360 = vadd.f32 %v156, %v359
    %v361 = vpop.f32.mrb[0].mxu0
    %362 = vmatprep.mubr.f32.mxu0 0.0
    %363 = vmatmul.mubr.f32.gmra.mrb[0].mxu0 %v92
    %v364 = vpop.f32.mrb[0].mxu0
    %v365 = vadd.f32 %v156, %v364
    %v366 = vpop.f32.mrb[0].mxu0
    %367 = vmatprep.mubr.f32.mxu0 0.0
    %368 = vmatmul.mubr.f32.gmra.mrb[0].mxu0 %v93
    %v369 = vpop.f32.mrb[0].mxu0
    %v370 = vadd.f32 %v156, %v369
    %v371 = vpop.f32.mrb[0].mxu0
    %372 = vmatprep.mubr.f32.mxu0 0.0
    %373 = vmatmul.mubr.f32.gmra.mrb[0].mxu0 %v94
    %v374 = vpop.f32.mrb[0].mxu0
    %v375 = vadd.f32 %v156, %v374
    %v376 = vpop.f32.mrb[0].mxu0
    %377 = vdwg.mxu0
    %378 = vst [vmem:[#allocation2] sm:$0xff] %v227
    %379 = vst [vmem:[#allocation2 + $0x8] sm:$0xff] %v229
    %380 = vst [vmem:[#allocation2 + $0x10] sm:$0xff] %v340
    %381 = vst [vmem:[#allocation2 + $0x18] sm:$0xff] %v233
    %382 = vst [vmem:[#allocation2 + $0x20] sm:$0xff] %v235
    %383 = vst [vmem:[#allocation2 + $0x28] sm:$0xff] %v345
    %384 = vst [vmem:[#allocation2 + $0x30] sm:$0xff] %v239
    %385 = vst [vmem:[#allocation2 + $0x38] sm:$0xff] %v241
    %386 = vst [vmem:[#allocation2 + $0x40] sm:$0xff] %v350
    %387 = vst [vmem:[#allocation2 + $0x48] sm:$0xff] %v245
    %388 = vst [vmem:[#allocation2 + $0x50] sm:$0xff] %v247
    %389 = vst [vmem:[#allocation2 + $0x58] sm:$0xff] %v355
    %390 = vst [vmem:[#allocation2 + $0x60] sm:$0xff] %v251
    %391 = vst [vmem:[#allocation2 + $0x68] sm:$0xff] %v253
    %392 = vst [vmem:[#allocation2 + $0x70] sm:$0xff] %v360
    %393 = vst [vmem:[#allocation2 + $0x78] sm:$0xff] %v257
    %394 = vst [vmem:[#allocation2 + $0x80] sm:$0xff] %v259
    %395 = vst [vmem:[#allocation2 + $0x88] sm:$0xff] %v365
    %396 = vst [vmem:[#allocation2 + $0x90] sm:$0xff] %v263
    %397 = vst [vmem:[#allocation2 + $0x98] sm:$0xff] %v265
    %398 = vst [vmem:[#allocation2 + $0xa0] sm:$0xff] %v370
    %399 = vst [vmem:[#allocation2 + $0xa8] sm:$0xff] %v269
    %400 = vst [vmem:[#allocation2 + $0xb0] sm:$0xff] %v271
    %401 = vst [vmem:[#allocation2 + $0xb8] sm:$0xff] %v375
    %v402 = vld [vmem:[#allocation9] sm:$0xff]
    %v403 = vld [vmem:[#allocation9 + $0x8] sm:$0xff]
    %v404 = vld [vmem:[#allocation9 + $0x10] sm:$0xff]
    %v405 = vld [vmem:[#allocation9 + $0x18] sm:$0xff]
    %v406 = vld [vmem:[#allocation9 + $0x20] sm:$0xff]
    %v407 = vld [vmem:[#allocation9 + $0x28] sm:$0xff]
    %v408 = vld [vmem:[#allocation9 + $0x30] sm:$0xff]
    %v409 = vld [vmem:[#allocation9 + $0x38] sm:$0xff]
    %v410 = vld [vmem:[#allocation9 + $0x40] sm:$0xff]
    %v411 = vld [vmem:[#allocation9 + $0x48] sm:$0xff]
    %v412 = vld [vmem:[#allocation9 + $0x50] sm:$0xff]
    %v413 = vld [vmem:[#allocation9 + $0x58] sm:$0xff]
    %v414 = vld [vmem:[#allocation9 + $0x60] sm:$0xff]
    %v415 = vld [vmem:[#allocation9 + $0x68] sm:$0xff]
    %v416 = vld [vmem:[#allocation9 + $0x70] sm:$0xff]
    %v417 = vld [vmem:[#allocation9 + $0x78] sm:$0xff]
    %v418 = vld [vmem:[#allocation9 + $0x80] sm:$0xff]
    %v419 = vld [vmem:[#allocation9 + $0x88] sm:$0xff]
    %v420 = vld [vmem:[#allocation9 + $0x90] sm:$0xff]
    %v421 = vld [vmem:[#allocation9 + $0x98] sm:$0xff]
    %v422 = vld [vmem:[#allocation9 + $0xa0] sm:$0xff]
    %v423 = vld [vmem:[#allocation9 + $0xa8] sm:$0xff]
    %v424 = vld [vmem:[#allocation9 + $0xb0] sm:$0xff]
    %v425 = vld [vmem:[#allocation9 + $0xb8] sm:$0xff]
    %v426 = vld [vmem:[#allocation9 + $0xc0] sm:$0xff]
    %v427 = vld [vmem:[#allocation9 + $0xc8] sm:$0xff]
    %v428 = vld [vmem:[#allocation9 + $0xd0] sm:$0xff]
    %v429 = vld [vmem:[#allocation9 + $0xd8] sm:$0xff]
    %v430 = vld [vmem:[#allocation9 + $0xe0] sm:$0xff]
    %v431 = vld [vmem:[#allocation9 + $0xe8] sm:$0xff]
    %v432 = vld [vmem:[#allocation9 + $0xf0] sm:$0xff]
    %v433 = vld [vmem:[#allocation9 + $0xf8] sm:$0xff]
    %v434 = vld [vmem:[#allocation9 + $0x100] sm:$0xff]
    %v435 = vld [vmem:[#allocation9 + $0x108] sm:$0xff]
    %v436 = vld [vmem:[#allocation9 + $0x110] sm:$0xff]
    %v437 = vld [vmem:[#allocation9 + $0x118] sm:$0xff]
    %v438 = vld [vmem:[#allocation9 + $0x120] sm:$0xff]
    %v439 = vld [vmem:[#allocation9 + $0x128] sm:$0xff]
    %v440 = vld [vmem:[#allocation9 + $0x130] sm:$0xff]
    %v441 = vld [vmem:[#allocation9 + $0x138] sm:$0xff]
    %v442 = vld [vmem:[#allocation9 + $0x140] sm:$0xff]
    %v443 = vld [vmem:[#allocation9 + $0x148] sm:$0xff]
    %v444 = vld [vmem:[#allocation9 + $0x150] sm:$0xff]
    %v445 = vld [vmem:[#allocation9 + $0x158] sm:$0xff]
    %v446 = vld [vmem:[#allocation9 + $0x160] sm:$0xff]
    %v447 = vld [vmem:[#allocation9 + $0x168] sm:$0xff]
    %v448 = vld [vmem:[#allocation9 + $0x170] sm:$0xff]
    %v449 = vld [vmem:[#allocation9 + $0x178] sm:$0xff]
    %v450 = vld [vmem:[%s4] sm:$0x1]
    %v452 = vlaneseq
    %v453 = vshrl.u32 %v452, 7
    %v454 = vsub.s32 0, %v453
    %v455 = vrot.slane %v450, %v454
    %v457 = vld [vmem:[#allocation3] sm:$0xff]
    %s458 = smul.u32 0, 3
    %s459 = smul.addr %s458, 8
    %s460 = scalar_lea.vmem [#allocation2], %s459
    %v461 = vld [vmem:[%s460] sm:$0xff]
    %v462 = vld [vmem:[%s460 + $0x8] sm:$0xff]
    %v463 = vld [vmem:[%s460 + $0x10] sm:$0xff]
    %464 = vmatprep.subr.mxu0 %v403
    %465 = vmatpush1.msra.mxu0 %v402
    %466 = vmatprep.subr.mxu0 %v406
    %467 = vmatpush1.msra.mxu0 %v405
    %468 = vmatprep.subr.mxu0 %v409
    %469 = vmatpush1.msra.mxu0 %v408
    %470 = vmatprep.subr.mxu0 %v412
    %471 = vmatpush1.msra.mxu0 %v411
    %472 = vmatprep.subr.mxu0 %v415
    %473 = vmatpush1.msra.mxu0 %v414
    %474 = vmatprep.subr.mxu0 %v418
    %475 = vmatpush1.msra.mxu0 %v417
    %476 = vmatprep.subr.mxu0 %v421
    %477 = vmatpush1.msra.mxu0 %v420
    %478 = vmatprep.subr.mxu0 %v424
    %479 = vmatpush1.msra.mxu0 %v423
    %480 = vmatprep.subr.mxu0 %v427
    %481 = vmatpush1.msra.mxu0 %v426
    %482 = vmatprep.subr.mxu0 %v430
    %483 = vmatpush1.msra.mxu0 %v429
    %484 = vmatprep.subr.mxu0 %v433
    %485 = vmatpush1.msra.mxu0 %v432
    %486 = vmatprep.subr.mxu0 %v436
    %487 = vmatpush1.msra.mxu0 %v435
    %488 = vmatprep.subr.mxu0 %v439
    %489 = vmatpush1.msra.mxu0 %v438
    %490 = vmatprep.subr.mxu0 %v442
    %491 = vmatpush1.msra.mxu0 %v441
    %492 = vmatprep.subr.mxu0 %v445
    %493 = vmatpush1.msra.mxu0 %v444
    %494 = vmatprep.subr.mxu0 %v448
    %495 = vmatpush1.msra.mxu0 %v447
    %496 = vmatprep.subr.mxu0 0.0
    %497 = vmatpush1.msra.mxu0 0.0
    %498 = vmatprep.subr.mxu0 0.0
    %499 = vmatpush1.msra.mxu0 0.0
    %500 = vmatprep.subr.mxu0 0.0
    %501 = vmatpush1.msra.mxu0 0.0
    %502 = vmatprep.subr.mxu0 0.0
    %503 = vmatpush1.msra.mxu0 0.0
    %504 = vmatprep.subr.mxu0 0.0
    %505 = vmatpush1.msra.mxu0 0.0
    %506 = vmatprep.subr.mxu0 0.0
    %507 = vmatpush1.msra.mxu0 0.0
    %508 = vmatprep.subr.mxu0 0.0
    %509 = vmatpush1.msra.mxu0 0.0
    %510 = vmatprep.subr.mxu0 0.0
    %511 = vmatpush1.msra.mxu0 0.0
    %512 = vmatprep.subr.mxu0 0.0
    %513 = vmatpush1.msra.mxu0 0.0
    %514 = vmatprep.subr.mxu0 0.0
    %515 = vmatpush1.msra.mxu0 0.0
    %516 = vmatprep.subr.mxu0 0.0
    %517 = vmatpush1.msra.mxu0 0.0
    %518 = vmatprep.subr.mxu0 0.0
    %519 = vmatpush1.msra.mxu0 0.0
    %520 = vmatprep.subr.mxu0 0.0
    %521 = vmatpush1.msra.mxu0 0.0
    %522 = vmatprep.subr.mxu0 0.0
    %523 = vmatpush1.msra.mxu0 0.0
    %524 = vmatprep.subr.mxu0 0.0
    %525 = vmatpush1.msra.mxu0 0.0
    %526 = vmatprep.subr.mxu0 0.0
    %527 = vmatpush1.msra.mxu0 0.0
    %528 = vmatprep.mubr.f32.mxu0 0.0
    %529 = vmatmul.mubr.f32.gmra.mrb[0].mxu0 %v457
    %v530 = vpop.f32.mrb[0].mxu0
    %v531 = vadd.f32 0.0, %v530
    %v532 = vpop.f32.mrb[0].mxu0
    %v533 = vadd.f32 0.0, %v532
    %534 = vdwg.mxu0
    %535 = vmatprep.subr.mxu0 0.0
    %536 = vmatpush1.msra.mxu0 %v404
    %537 = vmatprep.subr.mxu0 0.0
    %538 = vmatpush1.msra.mxu0 %v407
    %539 = vmatprep.subr.mxu0 0.0
    %540 = vmatpush1.msra.mxu0 %v410
    %541 = vmatprep.subr.mxu0 0.0
    %542 = vmatpush1.msra.mxu0 %v413
    %543 = vmatprep.subr.mxu0 0.0
    %544 = vmatpush1.msra.mxu0 %v416
    %545 = vmatprep.subr.mxu0 0.0
    %546 = vmatpush1.msra.mxu0 %v419
    %547 = vmatprep.subr.mxu0 0.0
    %548 = vmatpush1.msra.mxu0 %v422
    %549 = vmatprep.subr.mxu0 0.0
    %550 = vmatpush1.msra.mxu0 %v425
    %551 = vmatprep.subr.mxu0 0.0
    %552 = vmatpush1.msra.mxu0 %v428
    %553 = vmatprep.subr.mxu0 0.0
    %554 = vmatpush1.msra.mxu0 %v431
    %555 = vmatprep.subr.mxu0 0.0
    %556 = vmatpush1.msra.mxu0 %v434
    %557 = vmatprep.subr.mxu0 0.0
    %558 = vmatpush1.msra.mxu0 %v437
    %559 = vmatprep.subr.mxu0 0.0
    %560 = vmatpush1.msra.mxu0 %v440
    %561 = vmatprep.subr.mxu0 0.0
    %562 = vmatpush1.msra.mxu0 %v443
    %563 = vmatprep.subr.mxu0 0.0
    %564 = vmatpush1.msra.mxu0 %v446
    %565 = vmatprep.subr.mxu0 0.0
    %566 = vmatpush1.msra.mxu0 %v449
    %567 = vmatprep.subr.mxu0 0.0
    %568 = vmatpush1.msra.mxu0 0.0
    %569 = vmatprep.subr.mxu0 0.0
    %570 = vmatpush1.msra.mxu0 0.0
    %571 = vmatprep.subr.mxu0 0.0
    %572 = vmatpush1.msra.mxu0 0.0
    %573 = vmatprep.subr.mxu0 0.0
    %574 = vmatpush1.msra.mxu0 0.0
    %575 = vmatprep.subr.mxu0 0.0
    %576 = vmatpush1.msra.mxu0 0.0
    %577 = vmatprep.subr.mxu0 0.0
    %578 = vmatpush1.msra.mxu0 0.0
    %579 = vmatprep.subr.mxu0 0.0
    %580 = vmatpush1.msra.mxu0 0.0
    %581 = vmatprep.subr.mxu0 0.0
    %582 = vmatpush1.msra.mxu0 0.0
    %583 = vmatprep.subr.mxu0 0.0
    %584 = vmatpush1.msra.mxu0 0.0
    %585 = vmatprep.subr.mxu0 0.0
    %586 = vmatpush1.msra.mxu0 0.0
    %587 = vmatprep.subr.mxu0 0.0
    %588 = vmatpush1.msra.mxu0 0.0
    %589 = vmatprep.subr.mxu0 0.0
    %590 = vmatpush1.msra.mxu0 0.0
    %591 = vmatprep.subr.mxu0 0.0
    %592 = vmatpush1.msra.mxu0 0.0
    %593 = vmatprep.subr.mxu0 0.0
    %594 = vmatpush1.msra.mxu0 0.0
    %595 = vmatprep.subr.mxu0 0.0
    %596 = vmatpush1.msra.mxu0 0.0
    %597 = vmatprep.subr.mxu0 0.0
    %598 = vmatpush1.msra.mxu0 0.0
    %599 = vmatprep.mubr.f32.mxu0 0.0
    %600 = vmatmul.mubr.f32.gmra.mrb[0].mxu0 %v457
    %v601 = vpop.f32.mrb[0].mxu0
    %v602 = vadd.f32 0.0, %v601
    %v603 = vpop.f32.mrb[0].mxu0
    %604 = vdwg.mxu0
    %v605 = vadd.f32 %v461, %v531
    %v606 = vxor.u32 %v605, 2147483648
    %v607 = vmul.f32 %v606, 1.442695
    %v608 = vpow.pop %v607
    %v609 = vadd.f32 %v608, 1.0
    %v610 = vrcp.pop %v609
    %v611 = vmul.f32 1.0, %v610
    %v612 = vadd.f32 %v462, %v533
    %v613 = vxor.u32 %v612, 2147483648
    %v614 = vmul.f32 %v613, 1.442695
    %v615 = vpow.pop %v614
    %v616 = vadd.f32 %v615, 1.0
    %v617 = vrcp.pop %v616
    %v618 = vmul.f32 1.0, %v617
    %v619 = vadd.f32 %v602, %v455
    %v620 = vmul.f32 %v611, %v619
    %v621 = vadd.f32 %v463, %v620
    %v622 = vtanh.pop %v621
    %v623 = vsub.f32 %v457, %v622
    %v624 = vmul.f32 %v618, %v623
    %v625 = vadd.f32 %v622, %v624
    %s626 = smul.u32 1, 3
    %s627 = smul.addr %s626, 8
    %s628 = scalar_lea.vmem [#allocation2], %s627
    %v629 = vld [vmem:[%s628] sm:$0xff]
    %v630 = vld [vmem:[%s628 + $0x8] sm:$0xff]
    %v631 = vld [vmem:[%s628 + $0x10] sm:$0xff]
    %632 = vmatprep.subr.mxu0 %v403
    %633 = vmatpush1.msra.mxu0 %v402
    %634 = vmatprep.subr.mxu0 %v406
    %635 = vmatpush1.msra.mxu0 %v405
    %636 = vmatprep.subr.mxu0 %v409
    %637 = vmatpush1.msra.mxu0 %v408
    %638 = vmatprep.subr.mxu0 %v412
    %639 = vmatpush1.msra.mxu0 %v411
    %640 = vmatprep.subr.mxu0 %v415
    %641 = vmatpush1.msra.mxu0 %v414
    %642 = vmatprep.subr.mxu0 %v418
    %643 = vmatpush1.msra.mxu0 %v417
    %644 = vmatprep.subr.mxu0 %v421
    %645 = vmatpush1.msra.mxu0 %v420
    %646 = vmatprep.subr.mxu0 %v424
    %647 = vmatpush1.msra.mxu0 %v423
    %648 = vmatprep.subr.mxu0 %v427
    %649 = vmatpush1.msra.mxu0 %v426
    %650 = vmatprep.subr.mxu0 %v430
    %651 = vmatpush1.msra.mxu0 %v429
    %652 = vmatprep.subr.mxu0 %v433
    %653 = vmatpush1.msra.mxu0 %v432
    %654 = vmatprep.subr.mxu0 %v436
    %655 = vmatpush1.msra.mxu0 %v435
    %656 = vmatprep.subr.mxu0 %v439
    %657 = vmatpush1.msra.mxu0 %v438
    %658 = vmatprep.subr.mxu0 %v442
    %659 = vmatpush1.msra.mxu0 %v441
    %660 = vmatprep.subr.mxu0 %v445
    %661 = vmatpush1.msra.mxu0 %v444
    %662 = vmatprep.subr.mxu0 %v448
    %663 = vmatpush1.msra.mxu0 %v447
    %664 = vmatprep.subr.mxu0 0.0
    %665 = vmatpush1.msra.mxu0 0.0
    %666 = vmatprep.subr.mxu0 0.0
    %667 = vmatpush1.msra.mxu0 0.0
    %668 = vmatprep.subr.mxu0 0.0
    %669 = vmatpush1.msra.mxu0 0.0
    %670 = vmatprep.subr.mxu0 0.0
    %671 = vmatpush1.msra.mxu0 0.0
    %672 = vmatprep.subr.mxu0 0.0
    %673 = vmatpush1.msra.mxu0 0.0
    %674 = vmatprep.subr.mxu0 0.0
    %675 = vmatpush1.msra.mxu0 0.0
    %676 = vmatprep.subr.mxu0 0.0
    %677 = vmatpush1.msra.mxu0 0.0
    %678 = vmatprep.subr.mxu0 0.0
    %679 = vmatpush1.msra.mxu0 0.0
    %680 = vmatprep.subr.mxu0 0.0
    %681 = vmatpush1.msra.mxu0 0.0
    %682 = vmatprep.subr.mxu0 0.0
    %683 = vmatpush1.msra.mxu0 0.0
    %684 = vmatprep.subr.mxu0 0.0
    %685 = vmatpush1.msra.mxu0 0.0
    %686 = vmatprep.subr.mxu0 0.0
    %687 = vmatpush1.msra.mxu0 0.0
    %688 = vmatprep.subr.mxu0 0.0
    %689 = vmatpush1.msra.mxu0 0.0
    %690 = vmatprep.subr.mxu0 0.0
    %691 = vmatpush1.msra.mxu0 0.0
    %692 = vmatprep.subr.mxu0 0.0
    %693 = vmatpush1.msra.mxu0 0.0
    %694 = vmatprep.subr.mxu0 0.0
    %695 = vmatpush1.msra.mxu0 0.0
    %696 = vmatprep.mubr.f32.mxu0 0.0
    %697 = vmatmul.mubr.f32.gmra.mrb[0].mxu0 %v625
    %v698 = vpop.f32.mrb[0].mxu0
    %v699 = vadd.f32 0.0, %v698
    %v700 = vpop.f32.mrb[0].mxu0
    %v701 = vadd.f32 0.0, %v700
    %702 = vdwg.mxu0
    %703 = vmatprep.subr.mxu0 0.0
    %704 = vmatpush1.msra.mxu0 %v404
    %705 = vmatprep.subr.mxu0 0.0
    %706 = vmatpush1.msra.mxu0 %v407
    %707 = vmatprep.subr.mxu0 0.0
    %708 = vmatpush1.msra.mxu0 %v410
    %709 = vmatprep.subr.mxu0 0.0
    %710 = vmatpush1.msra.mxu0 %v413
    %711 = vmatprep.subr.mxu0 0.0
    %712 = vmatpush1.msra.mxu0 %v416
    %713 = vmatprep.subr.mxu0 0.0
    %714 = vmatpush1.msra.mxu0 %v419
    %715 = vmatprep.subr.mxu0 0.0
    %716 = vmatpush1.msra.mxu0 %v422
    %717 = vmatprep.subr.mxu0 0.0
    %718 = vmatpush1.msra.mxu0 %v425
    %719 = vmatprep.subr.mxu0 0.0
    %720 = vmatpush1.msra.mxu0 %v428
    %721 = vmatprep.subr.mxu0 0.0
    %722 = vmatpush1.msra.mxu0 %v431
    %723 = vmatprep.subr.mxu0 0.0
    %724 = vmatpush1.msra.mxu0 %v434
    %725 = vmatprep.subr.mxu0 0.0
    %726 = vmatpush1.msra.mxu0 %v437
    %727 = vmatprep.subr.mxu0 0.0
    %728 = vmatpush1.msra.mxu0 %v440
    %729 = vmatprep.subr.mxu0 0.0
    %730 = vmatpush1.msra.mxu0 %v443
    %731 = vmatprep.subr.mxu0 0.0
    %732 = vmatpush1.msra.mxu0 %v446
    %733 = vmatprep.subr.mxu0 0.0
    %734 = vmatpush1.msra.mxu0 %v449
    %735 = vmatprep.subr.mxu0 0.0
    %736 = vmatpush1.msra.mxu0 0.0
    %737 = vmatprep.subr.mxu0 0.0
    %738 = vmatpush1.msra.mxu0 0.0
    %739 = vmatprep.subr.mxu0 0.0
    %740 = vmatpush1.msra.mxu0 0.0
    %741 = vmatprep.subr.mxu0 0.0
    %742 = vmatpush1.msra.mxu0 0.0
    %743 = vmatprep.subr.mxu0 0.0
    %744 = vmatpush1.msra.mxu0 0.0
    %745 = vmatprep.subr.mxu0 0.0
    %746 = vmatpush1.msra.mxu0 0.0
    %747 = vmatprep.subr.mxu0 0.0
    %748 = vmatpush1.msra.mxu0 0.0
    %749 = vmatprep.subr.mxu0 0.0
    %750 = vmatpush1.msra.mxu0 0.0
    %751 = vmatprep.subr.mxu0 0.0
    %752 = vmatpush1.msra.mxu0 0.0
    %753 = vmatprep.subr.mxu0 0.0
    %754 = vmatpush1.msra.mxu0 0.0
    %755 = vmatprep.subr.mxu0 0.0
    %756 = vmatpush1.msra.mxu0 0.0
    %757 = vmatprep.subr.mxu0 0.0
    %758 = vmatpush1.msra.mxu0 0.0
    %759 = vmatprep.subr.mxu0 0.0
    %760 = vmatpush1.msra.mxu0 0.0
    %761 = vmatprep.subr.mxu0 0.0
    %762 = vmatpush1.msra.mxu0 0.0
    %763 = vmatprep.subr.mxu0 0.0
    %764 = vmatpush1.msra.mxu0 0.0
    %765 = vmatprep.subr.mxu0 0.0
    %766 = vmatpush1.msra.mxu0 0.0
    %767 = vmatprep.mubr.f32.mxu0 0.0
    %768 = vmatmul.mubr.f32.gmra.mrb[0].mxu0 %v625
    %v769 = vpop.f32.mrb[0].mxu0
    %v770 = vadd.f32 0.0, %v769
    %v771 = vpop.f32.mrb[0].mxu0
    %772 = vdwg.mxu0
    %v773 = vadd.f32 %v629, %v699
    %v774 = vxor.u32 %v773, 2147483648
    %v775 = vmul.f32 %v774, 1.442695
    %v776 = vpow.pop %v775
    %v777 = vadd.f32 %v776, 1.0
    %v778 = vrcp.pop %v777
    %v779 = vmul.f32 1.0, %v778
    %v780 = vadd.f32 %v630, %v701
    %v781 = vxor.u32 %v780, 2147483648
    %v782 = vmul.f32 %v781, 1.442695
    %v783 = vpow.pop %v782
    %v784 = vadd.f32 %v783, 1.0
    %v785 = vrcp.pop %v784
    %v786 = vmul.f32 1.0, %v785
    %v787 = vadd.f32 %v770, %v455
    %v788 = vmul.f32 %v779, %v787
    %v789 = vadd.f32 %v631, %v788
    %v790 = vtanh.pop %v789
    %v791 = vsub.f32 %v625, %v790
    %v792 = vmul.f32 %v786, %v791
    %v793 = vadd.f32 %v790, %v792
    %s794 = smul.u32 2, 3
    %s795 = smul.addr %s794, 8
    %s796 = scalar_lea.vmem [#allocation2], %s795
    %v797 = vld [vmem:[%s796] sm:$0xff]
    %v798 = vld [vmem:[%s796 + $0x8] sm:$0xff]
    %v799 = vld [vmem:[%s796 + $0x10] sm:$0xff]
    %800 = vmatprep.subr.mxu0 %v403
    %801 = vmatpush1.msra.mxu0 %v402
    %802 = vmatprep.subr.mxu0 %v406
    %803 = vmatpush1.msra.mxu0 %v405
    %804 = vmatprep.subr.mxu0 %v409
    %805 = vmatpush1.msra.mxu0 %v408
    %806 = vmatprep.subr.mxu0 %v412
    %807 = vmatpush1.msra.mxu0 %v411
    %808 = vmatprep.subr.mxu0 %v415
    %809 = vmatpush1.msra.mxu0 %v414
    %810 = vmatprep.subr.mxu0 %v418
    %811 = vmatpush1.msra.mxu0 %v417
    %812 = vmatprep.subr.mxu0 %v421
    %813 = vmatpush1.msra.mxu0 %v420
    %814 = vmatprep.subr.mxu0 %v424
    %815 = vmatpush1.msra.mxu0 %v423
    %816 = vmatprep.subr.mxu0 %v427
    %817 = vmatpush1.msra.mxu0 %v426
    %818 = vmatprep.subr.mxu0 %v430
    %819 = vmatpush1.msra.mxu0 %v429
    %820 = vmatprep.subr.mxu0 %v433
    %821 = vmatpush1.msra.mxu0 %v432
    %822 = vmatprep.subr.mxu0 %v436
    %823 = vmatpush1.msra.mxu0 %v435
    %824 = vmatprep.subr.mxu0 %v439
    %825 = vmatpush1.msra.mxu0 %v438
    %826 = vmatprep.subr.mxu0 %v442
    %827 = vmatpush1.msra.mxu0 %v441
    %828 = vmatprep.subr.mxu0 %v445
    %829 = vmatpush1.msra.mxu0 %v444
    %830 = vmatprep.subr.mxu0 %v448
    %831 = vmatpush1.msra.mxu0 %v447
    %832 = vmatprep.subr.mxu0 0.0
    %833 = vmatpush1.msra.mxu0 0.0
    %834 = vmatprep.subr.mxu0 0.0
    %835 = vmatpush1.msra.mxu0 0.0
    %836 = vmatprep.subr.mxu0 0.0
    %837 = vmatpush1.msra.mxu0 0.0
    %838 = vmatprep.subr.mxu0 0.0
    %839 = vmatpush1.msra.mxu0 0.0
    %840 = vmatprep.subr.mxu0 0.0
    %841 = vmatpush1.msra.mxu0 0.0
    %842 = vmatprep.subr.mxu0 0.0
    %843 = vmatpush1.msra.mxu0 0.0
    %844 = vmatprep.subr.mxu0 0.0
    %845 = vmatpush1.msra.mxu0 0.0
    %846 = vmatprep.subr.mxu0 0.0
    %847 = vmatpush1.msra.mxu0 0.0
    %848 = vmatprep.subr.mxu0 0.0
    %849 = vmatpush1.msra.mxu0 0.0
    %850 = vmatprep.subr.mxu0 0.0
    %851 = vmatpush1.msra.mxu0 0.0
    %852 = vmatprep.subr.mxu0 0.0
    %853 = vmatpush1.msra.mxu0 0.0
    %854 = vmatprep.subr.mxu0 0.0
    %855 = vmatpush1.msra.mxu0 0.0
    %856 = vmatprep.subr.mxu0 0.0
    %857 = vmatpush1.msra.mxu0 0.0
    %858 = vmatprep.subr.mxu0 0.0
    %859 = vmatpush1.msra.mxu0 0.0
    %860 = vmatprep.subr.mxu0 0.0
    %861 = vmatpush1.msra.mxu0 0.0
    %862 = vmatprep.subr.mxu0 0.0
    %863 = vmatpush1.msra.mxu0 0.0
    %864 = vmatprep.mubr.f32.mxu0 0.0
    %865 = vmatmul.mubr.f32.gmra.mrb[0].mxu0 %v793
    %v866 = vpop.f32.mrb[0].mxu0
    %v867 = vadd.f32 0.0, %v866
    %v868 = vpop.f32.mrb[0].mxu0
    %v869 = vadd.f32 0.0, %v868
    %870 = vdwg.mxu0
    %871 = vmatprep.subr.mxu0 0.0
    %872 = vmatpush1.msra.mxu0 %v404
    %873 = vmatprep.subr.mxu0 0.0
    %874 = vmatpush1.msra.mxu0 %v407
    %875 = vmatprep.subr.mxu0 0.0
    %876 = vmatpush1.msra.mxu0 %v410
    %877 = vmatprep.subr.mxu0 0.0
    %878 = vmatpush1.msra.mxu0 %v413
    %879 = vmatprep.subr.mxu0 0.0
    %880 = vmatpush1.msra.mxu0 %v416
    %881 = vmatprep.subr.mxu0 0.0
    %882 = vmatpush1.msra.mxu0 %v419
    %883 = vmatprep.subr.mxu0 0.0
    %884 = vmatpush1.msra.mxu0 %v422
    %885 = vmatprep.subr.mxu0 0.0
    %886 = vmatpush1.msra.mxu0 %v425
    %887 = vmatprep.subr.mxu0 0.0
    %888 = vmatpush1.msra.mxu0 %v428
    %889 = vmatprep.subr.mxu0 0.0
    %890 = vmatpush1.msra.mxu0 %v431
    %891 = vmatprep.subr.mxu0 0.0
    %892 = vmatpush1.msra.mxu0 %v434
    %893 = vmatprep.subr.mxu0 0.0
    %894 = vmatpush1.msra.mxu0 %v437
    %895 = vmatprep.subr.mxu0 0.0
    %896 = vmatpush1.msra.mxu0 %v440
    %897 = vmatprep.subr.mxu0 0.0
    %898 = vmatpush1.msra.mxu0 %v443
    %899 = vmatprep.subr.mxu0 0.0
    %900 = vmatpush1.msra.mxu0 %v446
    %901 = vmatprep.subr.mxu0 0.0
    %902 = vmatpush1.msra.mxu0 %v449
    %903 = vmatprep.subr.mxu0 0.0
    %904 = vmatpush1.msra.mxu0 0.0
    %905 = vmatprep.subr.mxu0 0.0
    %906 = vmatpush1.msra.mxu0 0.0
    %907 = vmatprep.subr.mxu0 0.0
    %908 = vmatpush1.msra.mxu0 0.0
    %909 = vmatprep.subr.mxu0 0.0
    %910 = vmatpush1.msra.mxu0 0.0
    %911 = vmatprep.subr.mxu0 0.0
    %912 = vmatpush1.msra.mxu0 0.0
    %913 = vmatprep.subr.mxu0 0.0
    %914 = vmatpush1.msra.mxu0 0.0
    %915 = vmatprep.subr.mxu0 0.0
    %916 = vmatpush1.msra.mxu0 0.0
    %917 = vmatprep.subr.mxu0 0.0
    %918 = vmatpush1.msra.mxu0 0.0
    %919 = vmatprep.subr.mxu0 0.0
    %920 = vmatpush1.msra.mxu0 0.0
    %921 = vmatprep.subr.mxu0 0.0
    %922 = vmatpush1.msra.mxu0 0.0
    %923 = vmatprep.subr.mxu0 0.0
    %924 = vmatpush1.msra.mxu0 0.0
    %925 = vmatprep.subr.mxu0 0.0
    %926 = vmatpush1.msra.mxu0 0.0
    %927 = vmatprep.subr.mxu0 0.0
    %928 = vmatpush1.msra.mxu0 0.0
    %929 = vmatprep.subr.mxu0 0.0
    %930 = vmatpush1.msra.mxu0 0.0
    %931 = vmatprep.subr.mxu0 0.0
    %932 = vmatpush1.msra.mxu0 0.0
    %933 = vmatprep.subr.mxu0 0.0
    %934 = vmatpush1.msra.mxu0 0.0
    %935 = vmatprep.mubr.f32.mxu0 0.0
    %936 = vmatmul.mubr.f32.gmra.mrb[0].mxu0 %v793
    %v937 = vpop.f32.mrb[0].mxu0
    %v938 = vadd.f32 0.0, %v937
    %v939 = vpop.f32.mrb[0].mxu0
    %940 = vdwg.mxu0
    %v941 = vadd.f32 %v797, %v867
    %v942 = vxor.u32 %v941, 2147483648
    %v943 = vmul.f32 %v942, 1.442695
    %v944 = vpow.pop %v943
    %v945 = vadd.f32 %v944, 1.0
    %v946 = vrcp.pop %v945
    %v947 = vmul.f32 1.0, %v946
    %v948 = vadd.f32 %v798, %v869
    %v949 = vxor.u32 %v948, 2147483648
    %v950 = vmul.f32 %v949, 1.442695
    %v951 = vpow.pop %v950
    %v952 = vadd.f32 %v951, 1.0
    %v953 = vrcp.pop %v952
    %v954 = vmul.f32 1.0, %v953
    %v955 = vadd.f32 %v938, %v455
    %v956 = vmul.f32 %v947, %v955
    %v957 = vadd.f32 %v799, %v956
    %v958 = vtanh.pop %v957
    %v959 = vsub.f32 %v793, %v958
    %v960 = vmul.f32 %v954, %v959
    %v961 = vadd.f32 %v958, %v960
    %s962 = smul.u32 3, 3
    %s963 = smul.addr %s962, 8
    %s964 = scalar_lea.vmem [#allocation2], %s963
    %v965 = vld [vmem:[%s964] sm:$0xff]
    %v966 = vld [vmem:[%s964 + $0x8] sm:$0xff]
    %v967 = vld [vmem:[%s964 + $0x10] sm:$0xff]
    %968 = vmatprep.subr.mxu0 %v403
    %969 = vmatpush1.msra.mxu0 %v402
    %970 = vmatprep.subr.mxu0 %v406
    %971 = vmatpush1.msra.mxu0 %v405
    %972 = vmatprep.subr.mxu0 %v409
    %973 = vmatpush1.msra.mxu0 %v408
    %974 = vmatprep.subr.mxu0 %v412
    %975 = vmatpush1.msra.mxu0 %v411
    %976 = vmatprep.subr.mxu0 %v415
    %977 = vmatpush1.msra.mxu0 %v414
    %978 = vmatprep.subr.mxu0 %v418
    %979 = vmatpush1.msra.mxu0 %v417
    %980 = vmatprep.subr.mxu0 %v421
    %981 = vmatpush1.msra.mxu0 %v420
    %982 = vmatprep.subr.mxu0 %v424
    %983 = vmatpush1.msra.mxu0 %v423
    %984 = vmatprep.subr.mxu0 %v427
    %985 = vmatpush1.msra.mxu0 %v426
    %986 = vmatprep.subr.mxu0 %v430
    %987 = vmatpush1.msra.mxu0 %v429
    %988 = vmatprep.subr.mxu0 %v433
    %989 = vmatpush1.msra.mxu0 %v432
    %990 = vmatprep.subr.mxu0 %v436
    %991 = vmatpush1.msra.mxu0 %v435
    %992 = vmatprep.subr.mxu0 %v439
    %993 = vmatpush1.msra.mxu0 %v438
    %994 = vmatprep.subr.mxu0 %v442
    %995 = vmatpush1.msra.mxu0 %v441
    %996 = vmatprep.subr.mxu0 %v445
    %997 = vmatpush1.msra.mxu0 %v444
    %998 = vmatprep.subr.mxu0 %v448
    %999 = vmatpush1.msra.mxu0 %v447
    %1000 = vmatprep.subr.mxu0 0.0
    %1001 = vmatpush1.msra.mxu0 0.0
    %1002 = vmatprep.subr.mxu0 0.0
    %1003 = vmatpush1.msra.mxu0 0.0
    %1004 = vmatprep.subr.mxu0 0.0
    %1005 = vmatpush1.msra.mxu0 0.0
    %1006 = vmatprep.subr.mxu0 0.0
    %1007 = vmatpush1.msra.mxu0 0.0
    %1008 = vmatprep.subr.mxu0 0.0
    %1009 = vmatpush1.msra.mxu0 0.0
    %1010 = vmatprep.subr.mxu0 0.0
    %1011 = vmatpush1.msra.mxu0 0.0
    %1012 = vmatprep.subr.mxu0 0.0
    %1013 = vmatpush1.msra.mxu0 0.0
    %1014 = vmatprep.subr.mxu0 0.0
    %1015 = vmatpush1.msra.mxu0 0.0
    %1016 = vmatprep.subr.mxu0 0.0
    %1017 = vmatpush1.msra.mxu0 0.0
    %1018 = vmatprep.subr.mxu0 0.0
    %1019 = vmatpush1.msra.mxu0 0.0
    %1020 = vmatprep.subr.mxu0 0.0
    %1021 = vmatpush1.msra.mxu0 0.0
    %1022 = vmatprep.subr.mxu0 0.0
    %1023 = vmatpush1.msra.mxu0 0.0
    %1024 = vmatprep.subr.mxu0 0.0
    %1025 = vmatpush1.msra.mxu0 0.0
    %1026 = vmatprep.subr.mxu0 0.0
    %1027 = vmatpush1.msra.mxu0 0.0
    %1028 = vmatprep.subr.mxu0 0.0
    %1029 = vmatpush1.msra.mxu0 0.0
    %1030 = vmatprep.subr.mxu0 0.0
    %1031 = vmatpush1.msra.mxu0 0.0
    %1032 = vmatprep.mubr.f32.mxu0 0.0
    %1033 = vmatmul.mubr.f32.gmra.mrb[0].mxu0 %v961
    %v1034 = vpop.f32.mrb[0].mxu0
    %v1035 = vadd.f32 0.0, %v1034
    %v1036 = vpop.f32.mrb[0].mxu0
    %v1037 = vadd.f32 0.0, %v1036
    %1038 = vdwg.mxu0
    %1039 = vmatprep.subr.mxu0 0.0
    %1040 = vmatpush1.msra.mxu0 %v404
    %1041 = vmatprep.subr.mxu0 0.0
    %1042 = vmatpush1.msra.mxu0 %v407
    %1043 = vmatprep.subr.mxu0 0.0
    %1044 = vmatpush1.msra.mxu0 %v410
    %1045 = vmatprep.subr.mxu0 0.0
    %1046 = vmatpush1.msra.mxu0 %v413
    %1047 = vmatprep.subr.mxu0 0.0
    %1048 = vmatpush1.msra.mxu0 %v416
    %1049 = vmatprep.subr.mxu0 0.0
    %1050 = vmatpush1.msra.mxu0 %v419
    %1051 = vmatprep.subr.mxu0 0.0
    %1052 = vmatpush1.msra.mxu0 %v422
    %1053 = vmatprep.subr.mxu0 0.0
    %1054 = vmatpush1.msra.mxu0 %v425
    %1055 = vmatprep.subr.mxu0 0.0
    %1056 = vmatpush1.msra.mxu0 %v428
    %1057 = vmatprep.subr.mxu0 0.0
    %1058 = vmatpush1.msra.mxu0 %v431
    %1059 = vmatprep.subr.mxu0 0.0
    %1060 = vmatpush1.msra.mxu0 %v434
    %1061 = vmatprep.subr.mxu0 0.0
    %1062 = vmatpush1.msra.mxu0 %v437
    %1063 = vmatprep.subr.mxu0 0.0
    %1064 = vmatpush1.msra.mxu0 %v440
    %1065 = vmatprep.subr.mxu0 0.0
    %1066 = vmatpush1.msra.mxu0 %v443
    %1067 = vmatprep.subr.mxu0 0.0
    %1068 = vmatpush1.msra.mxu0 %v446
    %1069 = vmatprep.subr.mxu0 0.0
    %1070 = vmatpush1.msra.mxu0 %v449
    %1071 = vmatprep.subr.mxu0 0.0
    %1072 = vmatpush1.msra.mxu0 0.0
    %1073 = vmatprep.subr.mxu0 0.0
    %1074 = vmatpush1.msra.mxu0 0.0
    %1075 = vmatprep.subr.mxu0 0.0
    %1076 = vmatpush1.msra.mxu0 0.0
    %1077 = vmatprep.subr.mxu0 0.0
    %1078 = vmatpush1.msra.mxu0 0.0
    %1079 = vmatprep.subr.mxu0 0.0
    %1080 = vmatpush1.msra.mxu0 0.0
    %1081 = vmatprep.subr.mxu0 0.0
    %1082 = vmatpush1.msra.mxu0 0.0
    %1083 = vmatprep.subr.mxu0 0.0
    %1084 = vmatpush1.msra.mxu0 0.0
    %1085 = vmatprep.subr.mxu0 0.0
    %1086 = vmatpush1.msra.mxu0 0.0
    %1087 = vmatprep.subr.mxu0 0.0
    %1088 = vmatpush1.msra.mxu0 0.0
    %1089 = vmatprep.subr.mxu0 0.0
    %1090 = vmatpush1.msra.mxu0 0.0
    %1091 = vmatprep.subr.mxu0 0.0
    %1092 = vmatpush1.msra.mxu0 0.0
    %1093 = vmatprep.subr.mxu0 0.0
    %1094 = vmatpush1.msra.mxu0 0.0
    %1095 = vmatprep.subr.mxu0 0.0
    %1096 = vmatpush1.msra.mxu0 0.0
    %1097 = vmatprep.subr.mxu0 0.0
    %1098 = vmatpush1.msra.mxu0 0.0
    %1099 = vmatprep.subr.mxu0 0.0
    %1100 = vmatpush1.msra.mxu0 0.0
    %1101 = vmatprep.subr.mxu0 0.0
    %1102 = vmatpush1.msra.mxu0 0.0
    %1103 = vmatprep.mubr.f32.mxu0 0.0
    %1104 = vmatmul.mubr.f32.gmra.mrb[0].mxu0 %v961
    %v1105 = vpop.f32.mrb[0].mxu0
    %v1106 = vadd.f32 0.0, %v1105
    %v1107 = vpop.f32.mrb[0].mxu0
    %1108 = vdwg.mxu0
    %v1109 = vadd.f32 %v965, %v1035
    %v1110 = vxor.u32 %v1109, 2147483648
    %v1111 = vmul.f32 %v1110, 1.442695
    %v1112 = vpow.pop %v1111
    %v1113 = vadd.f32 %v1112, 1.0
    %v1114 = vrcp.pop %v1113
    %v1115 = vmul.f32 1.0, %v1114
    %v1116 = vadd.f32 %v966, %v1037
    %v1117 = vxor.u32 %v1116, 2147483648
    %v1118 = vmul.f32 %v1117, 1.442695
    %v1119 = vpow.pop %v1118
    %v1120 = vadd.f32 %v1119, 1.0
    %v1121 = vrcp.pop %v1120
    %v1122 = vmul.f32 1.0, %v1121
    %v1123 = vadd.f32 %v1106, %v455
    %v1124 = vmul.f32 %v1115, %v1123
    %v1125 = vadd.f32 %v967, %v1124
    %v1126 = vtanh.pop %v1125
    %v1127 = vsub.f32 %v961, %v1126
    %v1128 = vmul.f32 %v1122, %v1127
    %v1129 = vadd.f32 %v1126, %v1128
    %s1130 = smul.u32 4, 3
    %s1131 = smul.addr %s1130, 8
    %s1132 = scalar_lea.vmem [#allocation2], %s1131
    %v1133 = vld [vmem:[%s1132] sm:$0xff]
    %v1134 = vld [vmem:[%s1132 + $0x8] sm:$0xff]
    %v1135 = vld [vmem:[%s1132 + $0x10] sm:$0xff]
    %1136 = vmatprep.subr.mxu0 %v403
    %1137 = vmatpush1.msra.mxu0 %v402
    %1138 = vmatprep.subr.mxu0 %v406
    %1139 = vmatpush1.msra.mxu0 %v405
    %1140 = vmatprep.subr.mxu0 %v409
    %1141 = vmatpush1.msra.mxu0 %v408
    %1142 = vmatprep.subr.mxu0 %v412
    %1143 = vmatpush1.msra.mxu0 %v411
    %1144 = vmatprep.subr.mxu0 %v415
    %1145 = vmatpush1.msra.mxu0 %v414
    %1146 = vmatprep.subr.mxu0 %v418
    %1147 = vmatpush1.msra.mxu0 %v417
    %1148 = vmatprep.subr.mxu0 %v421
    %1149 = vmatpush1.msra.mxu0 %v420
    %1150 = vmatprep.subr.mxu0 %v424
    %1151 = vmatpush1.msra.mxu0 %v423
    %1152 = vmatprep.subr.mxu0 %v427
    %1153 = vmatpush1.msra.mxu0 %v426
    %1154 = vmatprep.subr.mxu0 %v430
    %1155 = vmatpush1.msra.mxu0 %v429
    %1156 = vmatprep.subr.mxu0 %v433
    %1157 = vmatpush1.msra.mxu0 %v432
    %1158 = vmatprep.subr.mxu0 %v436
    %1159 = vmatpush1.msra.mxu0 %v435
    %1160 = vmatprep.subr.mxu0 %v439
    %1161 = vmatpush1.msra.mxu0 %v438
    %1162 = vmatprep.subr.mxu0 %v442
    %1163 = vmatpush1.msra.mxu0 %v441
    %1164 = vmatprep.subr.mxu0 %v445
    %1165 = vmatpush1.msra.mxu0 %v444
    %1166 = vmatprep.subr.mxu0 %v448
    %1167 = vmatpush1.msra.mxu0 %v447
    %1168 = vmatprep.subr.mxu0 0.0
    %1169 = vmatpush1.msra.mxu0 0.0
    %1170 = vmatprep.subr.mxu0 0.0
    %1171 = vmatpush1.msra.mxu0 0.0
    %1172 = vmatprep.subr.mxu0 0.0
    %1173 = vmatpush1.msra.mxu0 0.0
    %1174 = vmatprep.subr.mxu0 0.0
    %1175 = vmatpush1.msra.mxu0 0.0
    %1176 = vmatprep.subr.mxu0 0.0
    %1177 = vmatpush1.msra.mxu0 0.0
    %1178 = vmatprep.subr.mxu0 0.0
    %1179 = vmatpush1.msra.mxu0 0.0
    %1180 = vmatprep.subr.mxu0 0.0
    %1181 = vmatpush1.msra.mxu0 0.0
    %1182 = vmatprep.subr.mxu0 0.0
    %1183 = vmatpush1.msra.mxu0 0.0
    %1184 = vmatprep.subr.mxu0 0.0
    %1185 = vmatpush1.msra.mxu0 0.0
    %1186 = vmatprep.subr.mxu0 0.0
    %1187 = vmatpush1.msra.mxu0 0.0
    %1188 = vmatprep.subr.mxu0 0.0
    %1189 = vmatpush1.msra.mxu0 0.0
    %1190 = vmatprep.subr.mxu0 0.0
    %1191 = vmatpush1.msra.mxu0 0.0
    %1192 = vmatprep.subr.mxu0 0.0
    %1193 = vmatpush1.msra.mxu0 0.0
    %1194 = vmatprep.subr.mxu0 0.0
    %1195 = vmatpush1.msra.mxu0 0.0
    %1196 = vmatprep.subr.mxu0 0.0
    %1197 = vmatpush1.msra.mxu0 0.0
    %1198 = vmatprep.subr.mxu0 0.0
    %1199 = vmatpush1.msra.mxu0 0.0
    %1200 = vmatprep.mubr.f32.mxu0 0.0
    %1201 = vmatmul.mubr.f32.gmra.mrb[0].mxu0 %v1129
    %v1202 = vpop.f32.mrb[0].mxu0
    %v1203 = vadd.f32 0.0, %v1202
    %v1204 = vpop.f32.mrb[0].mxu0
    %v1205 = vadd.f32 0.0, %v1204
    %1206 = vdwg.mxu0
    %1207 = vmatprep.subr.mxu0 0.0
    %1208 = vmatpush1.msra.mxu0 %v404
    %1209 = vmatprep.subr.mxu0 0.0
    %1210 = vmatpush1.msra.mxu0 %v407
    %1211 = vmatprep.subr.mxu0 0.0
    %1212 = vmatpush1.msra.mxu0 %v410
    %1213 = vmatprep.subr.mxu0 0.0
    %1214 = vmatpush1.msra.mxu0 %v413
    %1215 = vmatprep.subr.mxu0 0.0
    %1216 = vmatpush1.msra.mxu0 %v416
    %1217 = vmatprep.subr.mxu0 0.0
    %1218 = vmatpush1.msra.mxu0 %v419
    %1219 = vmatprep.subr.mxu0 0.0
    %1220 = vmatpush1.msra.mxu0 %v422
    %1221 = vmatprep.subr.mxu0 0.0
    %1222 = vmatpush1.msra.mxu0 %v425
    %1223 = vmatprep.subr.mxu0 0.0
    %1224 = vmatpush1.msra.mxu0 %v428
    %1225 = vmatprep.subr.mxu0 0.0
    %1226 = vmatpush1.msra.mxu0 %v431
    %1227 = vmatprep.subr.mxu0 0.0
    %1228 = vmatpush1.msra.mxu0 %v434
    %1229 = vmatprep.subr.mxu0 0.0
    %1230 = vmatpush1.msra.mxu0 %v437
    %1231 = vmatprep.subr.mxu0 0.0
    %1232 = vmatpush1.msra.mxu0 %v440
    %1233 = vmatprep.subr.mxu0 0.0
    %1234 = vmatpush1.msra.mxu0 %v443
    %1235 = vmatprep.subr.mxu0 0.0
    %1236 = vmatpush1.msra.mxu0 %v446
    %1237 = vmatprep.subr.mxu0 0.0
    %1238 = vmatpush1.msra.mxu0 %v449
    %1239 = vmatprep.subr.mxu0 0.0
    %1240 = vmatpush1.msra.mxu0 0.0
    %1241 = vmatprep.subr.mxu0 0.0
    %1242 = vmatpush1.msra.mxu0 0.0
    %1243 = vmatprep.subr.mxu0 0.0
    %1244 = vmatpush1.msra.mxu0 0.0
    %1245 = vmatprep.subr.mxu0 0.0
    %1246 = vmatpush1.msra.mxu0 0.0
    %1247 = vmatprep.subr.mxu0 0.0
    %1248 = vmatpush1.msra.mxu0 0.0
    %1249 = vmatprep.subr.mxu0 0.0
    %1250 = vmatpush1.msra.mxu0 0.0
    %1251 = vmatprep.subr.mxu0 0.0
    %1252 = vmatpush1.msra.mxu0 0.0
    %1253 = vmatprep.subr.mxu0 0.0
    %1254 = vmatpush1.msra.mxu0 0.0
    %1255 = vmatprep.subr.mxu0 0.0
    %1256 = vmatpush1.msra.mxu0 0.0
    %1257 = vmatprep.subr.mxu0 0.0
    %1258 = vmatpush1.msra.mxu0 0.0
    %1259 = vmatprep.subr.mxu0 0.0
    %1260 = vmatpush1.msra.mxu0 0.0
    %1261 = vmatprep.subr.mxu0 0.0
    %1262 = vmatpush1.msra.mxu0 0.0
    %1263 = vmatprep.subr.mxu0 0.0
    %1264 = vmatpush1.msra.mxu0 0.0
    %1265 = vmatprep.subr.mxu0 0.0
    %1266 = vmatpush1.msra.mxu0 0.0
    %1267 = vmatprep.subr.mxu0 0.0
    %1268 = vmatpush1.msra.mxu0 0.0
    %1269 = vmatprep.subr.mxu0 0.0
    %1270 = vmatpush1.msra.mxu0 0.0
    %1271 = vmatprep.mubr.f32.mxu0 0.0
    %1272 = vmatmul.mubr.f32.gmra.mrb[0].mxu0 %v1129
    %v1273 = vpop.f32.mrb[0].mxu0
    %v1274 = vadd.f32 0.0, %v1273
    %v1275 = vpop.f32.mrb[0].mxu0
    %1276 = vdwg.mxu0
    %v1277 = vadd.f32 %v1133, %v1203
    %v1278 = vxor.u32 %v1277, 2147483648
    %v1279 = vmul.f32 %v1278, 1.442695
    %v1280 = vpow.pop %v1279
    %v1281 = vadd.f32 %v1280, 1.0
    %v1282 = vrcp.pop %v1281
    %v1283 = vmul.f32 1.0, %v1282
    %v1284 = vadd.f32 %v1134, %v1205
    %v1285 = vxor.u32 %v1284, 2147483648
    %v1286 = vmul.f32 %v1285, 1.442695
    %v1287 = vpow.pop %v1286
    %v1288 = vadd.f32 %v1287, 1.0
    %v1289 = vrcp.pop %v1288
    %v1290 = vmul.f32 1.0, %v1289
    %v1291 = vadd.f32 %v1274, %v455
    %v1292 = vmul.f32 %v1283, %v1291
    %v1293 = vadd.f32 %v1135, %v1292
    %v1294 = vtanh.pop %v1293
    %v1295 = vsub.f32 %v1129, %v1294
    %v1296 = vmul.f32 %v1290, %v1295
    %v1297 = vadd.f32 %v1294, %v1296
    %s1298 = smul.u32 5, 3
    %s1299 = smul.addr %s1298, 8
    %s1300 = scalar_lea.vmem [#allocation2], %s1299
    %v1301 = vld [vmem:[%s1300] sm:$0xff]
    %v1302 = vld [vmem:[%s1300 + $0x8] sm:$0xff]
    %v1303 = vld [vmem:[%s1300 + $0x10] sm:$0xff]
    %1304 = vmatprep.subr.mxu0 %v403
    %1305 = vmatpush1.msra.mxu0 %v402
    %1306 = vmatprep.subr.mxu0 %v406
    %1307 = vmatpush1.msra.mxu0 %v405
    %1308 = vmatprep.subr.mxu0 %v409
    %1309 = vmatpush1.msra.mxu0 %v408
    %1310 = vmatprep.subr.mxu0 %v412
    %1311 = vmatpush1.msra.mxu0 %v411
    %1312 = vmatprep.subr.mxu0 %v415
    %1313 = vmatpush1.msra.mxu0 %v414
    %1314 = vmatprep.subr.mxu0 %v418
    %1315 = vmatpush1.msra.mxu0 %v417
    %1316 = vmatprep.subr.mxu0 %v421
    %1317 = vmatpush1.msra.mxu0 %v420
    %1318 = vmatprep.subr.mxu0 %v424
    %1319 = vmatpush1.msra.mxu0 %v423
    %1320 = vmatprep.subr.mxu0 %v427
    %1321 = vmatpush1.msra.mxu0 %v426
    %1322 = vmatprep.subr.mxu0 %v430
    %1323 = vmatpush1.msra.mxu0 %v429
    %1324 = vmatprep.subr.mxu0 %v433
    %1325 = vmatpush1.msra.mxu0 %v432
    %1326 = vmatprep.subr.mxu0 %v436
    %1327 = vmatpush1.msra.mxu0 %v435
    %1328 = vmatprep.subr.mxu0 %v439
    %1329 = vmatpush1.msra.mxu0 %v438
    %1330 = vmatprep.subr.mxu0 %v442
    %1331 = vmatpush1.msra.mxu0 %v441
    %1332 = vmatprep.subr.mxu0 %v445
    %1333 = vmatpush1.msra.mxu0 %v444
    %1334 = vmatprep.subr.mxu0 %v448
    %1335 = vmatpush1.msra.mxu0 %v447
    %1336 = vmatprep.subr.mxu0 0.0
    %1337 = vmatpush1.msra.mxu0 0.0
    %1338 = vmatprep.subr.mxu0 0.0
    %1339 = vmatpush1.msra.mxu0 0.0
    %1340 = vmatprep.subr.mxu0 0.0
    %1341 = vmatpush1.msra.mxu0 0.0
    %1342 = vmatprep.subr.mxu0 0.0
    %1343 = vmatpush1.msra.mxu0 0.0
    %1344 = vmatprep.subr.mxu0 0.0
    %1345 = vmatpush1.msra.mxu0 0.0
    %1346 = vmatprep.subr.mxu0 0.0
    %1347 = vmatpush1.msra.mxu0 0.0
    %1348 = vmatprep.subr.mxu0 0.0
    %1349 = vmatpush1.msra.mxu0 0.0
    %1350 = vmatprep.subr.mxu0 0.0
    %1351 = vmatpush1.msra.mxu0 0.0
    %1352 = vmatprep.subr.mxu0 0.0
    %1353 = vmatpush1.msra.mxu0 0.0
    %1354 = vmatprep.subr.mxu0 0.0
    %1355 = vmatpush1.msra.mxu0 0.0
    %1356 = vmatprep.subr.mxu0 0.0
    %1357 = vmatpush1.msra.mxu0 0.0
    %1358 = vmatprep.subr.mxu0 0.0
    %1359 = vmatpush1.msra.mxu0 0.0
    %1360 = vmatprep.subr.mxu0 0.0
    %1361 = vmatpush1.msra.mxu0 0.0
    %1362 = vmatprep.subr.mxu0 0.0
    %1363 = vmatpush1.msra.mxu0 0.0
    %1364 = vmatprep.subr.mxu0 0.0
    %1365 = vmatpush1.msra.mxu0 0.0
    %1366 = vmatprep.subr.mxu0 0.0
    %1367 = vmatpush1.msra.mxu0 0.0
    %1368 = vmatprep.mubr.f32.mxu0 0.0
    %1369 = vmatmul.mubr.f32.gmra.mrb[0].mxu0 %v1297
    %v1370 = vpop.f32.mrb[0].mxu0
    %v1371 = vadd.f32 0.0, %v1370
    %v1372 = vpop.f32.mrb[0].mxu0
    %v1373 = vadd.f32 0.0, %v1372
    %1374 = vdwg.mxu0
    %1375 = vmatprep.subr.mxu0 0.0
    %1376 = vmatpush1.msra.mxu0 %v404
    %1377 = vmatprep.subr.mxu0 0.0
    %1378 = vmatpush1.msra.mxu0 %v407
    %1379 = vmatprep.subr.mxu0 0.0
    %1380 = vmatpush1.msra.mxu0 %v410
    %1381 = vmatprep.subr.mxu0 0.0
    %1382 = vmatpush1.msra.mxu0 %v413
    %1383 = vmatprep.subr.mxu0 0.0
    %1384 = vmatpush1.msra.mxu0 %v416
    %1385 = vmatprep.subr.mxu0 0.0
    %1386 = vmatpush1.msra.mxu0 %v419
    %1387 = vmatprep.subr.mxu0 0.0
    %1388 = vmatpush1.msra.mxu0 %v422
    %1389 = vmatprep.subr.mxu0 0.0
    %1390 = vmatpush1.msra.mxu0 %v425
    %1391 = vmatprep.subr.mxu0 0.0
    %1392 = vmatpush1.msra.mxu0 %v428
    %1393 = vmatprep.subr.mxu0 0.0
    %1394 = vmatpush1.msra.mxu0 %v431
    %1395 = vmatprep.subr.mxu0 0.0
    %1396 = vmatpush1.msra.mxu0 %v434
    %1397 = vmatprep.subr.mxu0 0.0
    %1398 = vmatpush1.msra.mxu0 %v437
    %1399 = vmatprep.subr.mxu0 0.0
    %1400 = vmatpush1.msra.mxu0 %v440
    %1401 = vmatprep.subr.mxu0 0.0
    %1402 = vmatpush1.msra.mxu0 %v443
    %1403 = vmatprep.subr.mxu0 0.0
    %1404 = vmatpush1.msra.mxu0 %v446
    %1405 = vmatprep.subr.mxu0 0.0
    %1406 = vmatpush1.msra.mxu0 %v449
    %1407 = vmatprep.subr.mxu0 0.0
    %1408 = vmatpush1.msra.mxu0 0.0
    %1409 = vmatprep.subr.mxu0 0.0
    %1410 = vmatpush1.msra.mxu0 0.0
    %1411 = vmatprep.subr.mxu0 0.0
    %1412 = vmatpush1.msra.mxu0 0.0
    %1413 = vmatprep.subr.mxu0 0.0
    %1414 = vmatpush1.msra.mxu0 0.0
    %1415 = vmatprep.subr.mxu0 0.0
    %1416 = vmatpush1.msra.mxu0 0.0
    %1417 = vmatprep.subr.mxu0 0.0
    %1418 = vmatpush1.msra.mxu0 0.0
    %1419 = vmatprep.subr.mxu0 0.0
    %1420 = vmatpush1.msra.mxu0 0.0
    %1421 = vmatprep.subr.mxu0 0.0
    %1422 = vmatpush1.msra.mxu0 0.0
    %1423 = vmatprep.subr.mxu0 0.0
    %1424 = vmatpush1.msra.mxu0 0.0
    %1425 = vmatprep.subr.mxu0 0.0
    %1426 = vmatpush1.msra.mxu0 0.0
    %1427 = vmatprep.subr.mxu0 0.0
    %1428 = vmatpush1.msra.mxu0 0.0
    %1429 = vmatprep.subr.mxu0 0.0
    %1430 = vmatpush1.msra.mxu0 0.0
    %1431 = vmatprep.subr.mxu0 0.0
    %1432 = vmatpush1.msra.mxu0 0.0
    %1433 = vmatprep.subr.mxu0 0.0
    %1434 = vmatpush1.msra.mxu0 0.0
    %1435 = vmatprep.subr.mxu0 0.0
    %1436 = vmatpush1.msra.mxu0 0.0
    %1437 = vmatprep.subr.mxu0 0.0
    %1438 = vmatpush1.msra.mxu0 0.0
    %1439 = vmatprep.mubr.f32.mxu0 0.0
    %1440 = vmatmul.mubr.f32.gmra.mrb[0].mxu0 %v1297
    %v1441 = vpop.f32.mrb[0].mxu0
    %v1442 = vadd.f32 0.0, %v1441
    %v1443 = vpop.f32.mrb[0].mxu0
    %1444 = vdwg.mxu0
    %v1445 = vadd.f32 %v1301, %v1371
    %v1446 = vxor.u32 %v1445, 2147483648
    %v1447 = vmul.f32 %v1446, 1.442695
    %v1448 = vpow.pop %v1447
    %v1449 = vadd.f32 %v1448, 1.0
    %v1450 = vrcp.pop %v1449
    %v1451 = vmul.f32 1.0, %v1450
    %v1452 = vadd.f32 %v1302, %v1373
    %v1453 = vxor.u32 %v1452, 2147483648
    %v1454 = vmul.f32 %v1453, 1.442695
    %v1455 = vpow.pop %v1454
    %v1456 = vadd.f32 %v1455, 1.0
    %v1457 = vrcp.pop %v1456
    %v1458 = vmul.f32 1.0, %v1457
    %v1459 = vadd.f32 %v1442, %v455
    %v1460 = vmul.f32 %v1451, %v1459
    %v1461 = vadd.f32 %v1303, %v1460
    %v1462 = vtanh.pop %v1461
    %v1463 = vsub.f32 %v1297, %v1462
    %v1464 = vmul.f32 %v1458, %v1463
    %v1465 = vadd.f32 %v1462, %v1464
    %s1466 = smul.u32 6, 3
    %s1467 = smul.addr %s1466, 8
    %s1468 = scalar_lea.vmem [#allocation2], %s1467
    %v1469 = vld [vmem:[%s1468] sm:$0xff]
    %v1470 = vld [vmem:[%s1468 + $0x8] sm:$0xff]
    %v1471 = vld [vmem:[%s1468 + $0x10] sm:$0xff]
    %1472 = vmatprep.subr.mxu0 %v403
    %1473 = vmatpush1.msra.mxu0 %v402
    %1474 = vmatprep.subr.mxu0 %v406
    %1475 = vmatpush1.msra.mxu0 %v405
    %1476 = vmatprep.subr.mxu0 %v409
    %1477 = vmatpush1.msra.mxu0 %v408
    %1478 = vmatprep.subr.mxu0 %v412
    %1479 = vmatpush1.msra.mxu0 %v411
    %1480 = vmatprep.subr.mxu0 %v415
    %1481 = vmatpush1.msra.mxu0 %v414
    %1482 = vmatprep.subr.mxu0 %v418
    %1483 = vmatpush1.msra.mxu0 %v417
    %1484 = vmatprep.subr.mxu0 %v421
    %1485 = vmatpush1.msra.mxu0 %v420
    %1486 = vmatprep.subr.mxu0 %v424
    %1487 = vmatpush1.msra.mxu0 %v423
    %1488 = vmatprep.subr.mxu0 %v427
    %1489 = vmatpush1.msra.mxu0 %v426
    %1490 = vmatprep.subr.mxu0 %v430
    %1491 = vmatpush1.msra.mxu0 %v429
    %1492 = vmatprep.subr.mxu0 %v433
    %1493 = vmatpush1.msra.mxu0 %v432
    %1494 = vmatprep.subr.mxu0 %v436
    %1495 = vmatpush1.msra.mxu0 %v435
    %1496 = vmatprep.subr.mxu0 %v439
    %1497 = vmatpush1.msra.mxu0 %v438
    %1498 = vmatprep.subr.mxu0 %v442
    %1499 = vmatpush1.msra.mxu0 %v441
    %1500 = vmatprep.subr.mxu0 %v445
    %1501 = vmatpush1.msra.mxu0 %v444
    %1502 = vmatprep.subr.mxu0 %v448
    %1503 = vmatpush1.msra.mxu0 %v447
    %1504 = vmatprep.subr.mxu0 0.0
    %1505 = vmatpush1.msra.mxu0 0.0
    %1506 = vmatprep.subr.mxu0 0.0
    %1507 = vmatpush1.msra.mxu0 0.0
    %1508 = vmatprep.subr.mxu0 0.0
    %1509 = vmatpush1.msra.mxu0 0.0
    %1510 = vmatprep.subr.mxu0 0.0
    %1511 = vmatpush1.msra.mxu0 0.0
    %1512 = vmatprep.subr.mxu0 0.0
    %1513 = vmatpush1.msra.mxu0 0.0
    %1514 = vmatprep.subr.mxu0 0.0
    %1515 = vmatpush1.msra.mxu0 0.0
    %1516 = vmatprep.subr.mxu0 0.0
    %1517 = vmatpush1.msra.mxu0 0.0
    %1518 = vmatprep.subr.mxu0 0.0
    %1519 = vmatpush1.msra.mxu0 0.0
    %1520 = vmatprep.subr.mxu0 0.0
    %1521 = vmatpush1.msra.mxu0 0.0
    %1522 = vmatprep.subr.mxu0 0.0
    %1523 = vmatpush1.msra.mxu0 0.0
    %1524 = vmatprep.subr.mxu0 0.0
    %1525 = vmatpush1.msra.mxu0 0.0
    %1526 = vmatprep.subr.mxu0 0.0
    %1527 = vmatpush1.msra.mxu0 0.0
    %1528 = vmatprep.subr.mxu0 0.0
    %1529 = vmatpush1.msra.mxu0 0.0
    %1530 = vmatprep.subr.mxu0 0.0
    %1531 = vmatpush1.msra.mxu0 0.0
    %1532 = vmatprep.subr.mxu0 0.0
    %1533 = vmatpush1.msra.mxu0 0.0
    %1534 = vmatprep.subr.mxu0 0.0
    %1535 = vmatpush1.msra.mxu0 0.0
    %1536 = vmatprep.mubr.f32.mxu0 0.0
    %1537 = vmatmul.mubr.f32.gmra.mrb[0].mxu0 %v1465
    %v1538 = vpop.f32.mrb[0].mxu0
    %v1539 = vadd.f32 0.0, %v1538
    %v1540 = vpop.f32.mrb[0].mxu0
    %v1541 = vadd.f32 0.0, %v1540
    %1542 = vdwg.mxu0
    %1543 = vmatprep.subr.mxu0 0.0
    %1544 = vmatpush1.msra.mxu0 %v404
    %1545 = vmatprep.subr.mxu0 0.0
    %1546 = vmatpush1.msra.mxu0 %v407
    %1547 = vmatprep.subr.mxu0 0.0
    %1548 = vmatpush1.msra.mxu0 %v410
    %1549 = vmatprep.subr.mxu0 0.0
    %1550 = vmatpush1.msra.mxu0 %v413
    %1551 = vmatprep.subr.mxu0 0.0
    %1552 = vmatpush1.msra.mxu0 %v416
    %1553 = vmatprep.subr.mxu0 0.0
    %1554 = vmatpush1.msra.mxu0 %v419
    %1555 = vmatprep.subr.mxu0 0.0
    %1556 = vmatpush1.msra.mxu0 %v422
    %1557 = vmatprep.subr.mxu0 0.0
    %1558 = vmatpush1.msra.mxu0 %v425
    %1559 = vmatprep.subr.mxu0 0.0
    %1560 = vmatpush1.msra.mxu0 %v428
    %1561 = vmatprep.subr.mxu0 0.0
    %1562 = vmatpush1.msra.mxu0 %v431
    %1563 = vmatprep.subr.mxu0 0.0
    %1564 = vmatpush1.msra.mxu0 %v434
    %1565 = vmatprep.subr.mxu0 0.0
    %1566 = vmatpush1.msra.mxu0 %v437
    %1567 = vmatprep.subr.mxu0 0.0
    %1568 = vmatpush1.msra.mxu0 %v440
    %1569 = vmatprep.subr.mxu0 0.0
    %1570 = vmatpush1.msra.mxu0 %v443
    %1571 = vmatprep.subr.mxu0 0.0
    %1572 = vmatpush1.msra.mxu0 %v446
    %1573 = vmatprep.subr.mxu0 0.0
    %1574 = vmatpush1.msra.mxu0 %v449
    %1575 = vmatprep.subr.mxu0 0.0
    %1576 = vmatpush1.msra.mxu0 0.0
    %1577 = vmatprep.subr.mxu0 0.0
    %1578 = vmatpush1.msra.mxu0 0.0
    %1579 = vmatprep.subr.mxu0 0.0
    %1580 = vmatpush1.msra.mxu0 0.0
    %1581 = vmatprep.subr.mxu0 0.0
    %1582 = vmatpush1.msra.mxu0 0.0
    %1583 = vmatprep.subr.mxu0 0.0
    %1584 = vmatpush1.msra.mxu0 0.0
    %1585 = vmatprep.subr.mxu0 0.0
    %1586 = vmatpush1.msra.mxu0 0.0
    %1587 = vmatprep.subr.mxu0 0.0
    %1588 = vmatpush1.msra.mxu0 0.0
    %1589 = vmatprep.subr.mxu0 0.0
    %1590 = vmatpush1.msra.mxu0 0.0
    %1591 = vmatprep.subr.mxu0 0.0
    %1592 = vmatpush1.msra.mxu0 0.0
    %1593 = vmatprep.subr.mxu0 0.0
    %1594 = vmatpush1.msra.mxu0 0.0
    %1595 = vmatprep.subr.mxu0 0.0
    %1596 = vmatpush1.msra.mxu0 0.0
    %1597 = vmatprep.subr.mxu0 0.0
    %1598 = vmatpush1.msra.mxu0 0.0
    %1599 = vmatprep.subr.mxu0 0.0
    %1600 = vmatpush1.msra.mxu0 0.0
    %1601 = vmatprep.subr.mxu0 0.0
    %1602 = vmatpush1.msra.mxu0 0.0
    %1603 = vmatprep.subr.mxu0 0.0
    %1604 = vmatpush1.msra.mxu0 0.0
    %1605 = vmatprep.subr.mxu0 0.0
    %1606 = vmatpush1.msra.mxu0 0.0
    %1607 = vmatprep.mubr.f32.mxu0 0.0
    %1608 = vmatmul.mubr.f32.gmra.mrb[0].mxu0 %v1465
    %v1609 = vpop.f32.mrb[0].mxu0
    %v1610 = vadd.f32 0.0, %v1609
    %v1611 = vpop.f32.mrb[0].mxu0
    %1612 = vdwg.mxu0
    %v1613 = vadd.f32 %v1469, %v1539
    %v1614 = vxor.u32 %v1613, 2147483648
    %v1615 = vmul.f32 %v1614, 1.442695
    %v1616 = vpow.pop %v1615
    %v1617 = vadd.f32 %v1616, 1.0
    %v1618 = vrcp.pop %v1617
    %v1619 = vmul.f32 1.0, %v1618
    %v1620 = vadd.f32 %v1470, %v1541
    %v1621 = vxor.u32 %v1620, 2147483648
    %v1622 = vmul.f32 %v1621, 1.442695
    %v1623 = vpow.pop %v1622
    %v1624 = vadd.f32 %v1623, 1.0
    %v1625 = vrcp.pop %v1624
    %v1626 = vmul.f32 1.0, %v1625
    %v1627 = vadd.f32 %v1610, %v455
    %v1628 = vmul.f32 %v1619, %v1627
    %v1629 = vadd.f32 %v1471, %v1628
    %v1630 = vtanh.pop %v1629
    %v1631 = vsub.f32 %v1465, %v1630
    %v1632 = vmul.f32 %v1626, %v1631
    %v1633 = vadd.f32 %v1630, %v1632
    %s1634 = smul.u32 7, 3
    %s1635 = smul.addr %s1634, 8
    %s1636 = scalar_lea.vmem [#allocation2], %s1635
    %v1637 = vld [vmem:[%s1636] sm:$0xff]
    %v1638 = vld [vmem:[%s1636 + $0x8] sm:$0xff]
    %v1639 = vld [vmem:[%s1636 + $0x10] sm:$0xff]
    %1640 = vmatprep.subr.mxu0 %v403
    %1641 = vmatpush1.msra.mxu0 %v402
    %1642 = vmatprep.subr.mxu0 %v406
    %1643 = vmatpush1.msra.mxu0 %v405
    %1644 = vmatprep.subr.mxu0 %v409
    %1645 = vmatpush1.msra.mxu0 %v408
    %1646 = vmatprep.subr.mxu0 %v412
    %1647 = vmatpush1.msra.mxu0 %v411
    %1648 = vmatprep.subr.mxu0 %v415
    %1649 = vmatpush1.msra.mxu0 %v414
    %1650 = vmatprep.subr.mxu0 %v418
    %1651 = vmatpush1.msra.mxu0 %v417
    %1652 = vmatprep.subr.mxu0 %v421
    %1653 = vmatpush1.msra.mxu0 %v420
    %1654 = vmatprep.subr.mxu0 %v424
    %1655 = vmatpush1.msra.mxu0 %v423
    %1656 = vmatprep.subr.mxu0 %v427
    %1657 = vmatpush1.msra.mxu0 %v426
    %1658 = vmatprep.subr.mxu0 %v430
    %1659 = vmatpush1.msra.mxu0 %v429
    %1660 = vmatprep.subr.mxu0 %v433
    %1661 = vmatpush1.msra.mxu0 %v432
    %1662 = vmatprep.subr.mxu0 %v436
    %1663 = vmatpush1.msra.mxu0 %v435
    %1664 = vmatprep.subr.mxu0 %v439
    %1665 = vmatpush1.msra.mxu0 %v438
    %1666 = vmatprep.subr.mxu0 %v442
    %1667 = vmatpush1.msra.mxu0 %v441
    %1668 = vmatprep.subr.mxu0 %v445
    %1669 = vmatpush1.msra.mxu0 %v444
    %1670 = vmatprep.subr.mxu0 %v448
    %1671 = vmatpush1.msra.mxu0 %v447
    %1672 = vmatprep.subr.mxu0 0.0
    %1673 = vmatpush1.msra.mxu0 0.0
    %1674 = vmatprep.subr.mxu0 0.0
    %1675 = vmatpush1.msra.mxu0 0.0
    %1676 = vmatprep.subr.mxu0 0.0
    %1677 = vmatpush1.msra.mxu0 0.0
    %1678 = vmatprep.subr.mxu0 0.0
    %1679 = vmatpush1.msra.mxu0 0.0
    %1680 = vmatprep.subr.mxu0 0.0
    %1681 = vmatpush1.msra.mxu0 0.0
    %1682 = vmatprep.subr.mxu0 0.0
    %1683 = vmatpush1.msra.mxu0 0.0
    %1684 = vmatprep.subr.mxu0 0.0
    %1685 = vmatpush1.msra.mxu0 0.0
    %1686 = vmatprep.subr.mxu0 0.0
    %1687 = vmatpush1.msra.mxu0 0.0
    %1688 = vmatprep.subr.mxu0 0.0
    %1689 = vmatpush1.msra.mxu0 0.0
    %1690 = vmatprep.subr.mxu0 0.0
    %1691 = vmatpush1.msra.mxu0 0.0
    %1692 = vmatprep.subr.mxu0 0.0
    %1693 = vmatpush1.msra.mxu0 0.0
    %1694 = vmatprep.subr.mxu0 0.0
    %1695 = vmatpush1.msra.mxu0 0.0
    %1696 = vmatprep.subr.mxu0 0.0
    %1697 = vmatpush1.msra.mxu0 0.0
    %1698 = vmatprep.subr.mxu0 0.0
    %1699 = vmatpush1.msra.mxu0 0.0
    %1700 = vmatprep.subr.mxu0 0.0
    %1701 = vmatpush1.msra.mxu0 0.0
    %1702 = vmatprep.subr.mxu0 0.0
    %1703 = vmatpush1.msra.mxu0 0.0
    %1704 = vmatprep.mubr.f32.mxu0 0.0
    %1705 = vmatmul.mubr.f32.gmra.mrb[0].mxu0 %v1633
    %v1706 = vpop.f32.mrb[0].mxu0
    %v1707 = vadd.f32 0.0, %v1706
    %v1708 = vpop.f32.mrb[0].mxu0
    %v1709 = vadd.f32 0.0, %v1708
    %1710 = vdwg.mxu0
    %1711 = vmatprep.subr.mxu0 0.0
    %1712 = vmatpush1.msra.mxu0 %v404
    %1713 = vmatprep.subr.mxu0 0.0
    %1714 = vmatpush1.msra.mxu0 %v407
    %1715 = vmatprep.subr.mxu0 0.0
    %1716 = vmatpush1.msra.mxu0 %v410
    %1717 = vmatprep.subr.mxu0 0.0
    %1718 = vmatpush1.msra.mxu0 %v413
    %1719 = vmatprep.subr.mxu0 0.0
    %1720 = vmatpush1.msra.mxu0 %v416
    %1721 = vmatprep.subr.mxu0 0.0
    %1722 = vmatpush1.msra.mxu0 %v419
    %1723 = vmatprep.subr.mxu0 0.0
    %1724 = vmatpush1.msra.mxu0 %v422
    %1725 = vmatprep.subr.mxu0 0.0
    %1726 = vmatpush1.msra.mxu0 %v425
    %1727 = vmatprep.subr.mxu0 0.0
    %1728 = vmatpush1.msra.mxu0 %v428
    %1729 = vmatprep.subr.mxu0 0.0
    %1730 = vmatpush1.msra.mxu0 %v431
    %1731 = vmatprep.subr.mxu0 0.0
    %1732 = vmatpush1.msra.mxu0 %v434
    %1733 = vmatprep.subr.mxu0 0.0
    %1734 = vmatpush1.msra.mxu0 %v437
    %1735 = vmatprep.subr.mxu0 0.0
    %1736 = vmatpush1.msra.mxu0 %v440
    %1737 = vmatprep.subr.mxu0 0.0
    %1738 = vmatpush1.msra.mxu0 %v443
    %1739 = vmatprep.subr.mxu0 0.0
    %1740 = vmatpush1.msra.mxu0 %v446
    %1741 = vmatprep.subr.mxu0 0.0
    %1742 = vmatpush1.msra.mxu0 %v449
    %1743 = vmatprep.subr.mxu0 0.0
    %1744 = vmatpush1.msra.mxu0 0.0
    %1745 = vmatprep.subr.mxu0 0.0
    %1746 = vmatpush1.msra.mxu0 0.0
    %1747 = vmatprep.subr.mxu0 0.0
    %1748 = vmatpush1.msra.mxu0 0.0
    %1749 = vmatprep.subr.mxu0 0.0
    %1750 = vmatpush1.msra.mxu0 0.0
    %1751 = vmatprep.subr.mxu0 0.0
    %1752 = vmatpush1.msra.mxu0 0.0
    %1753 = vmatprep.subr.mxu0 0.0
    %1754 = vmatpush1.msra.mxu0 0.0
    %1755 = vmatprep.subr.mxu0 0.0
    %1756 = vmatpush1.msra.mxu0 0.0
    %1757 = vmatprep.subr.mxu0 0.0
    %1758 = vmatpush1.msra.mxu0 0.0
    %1759 = vmatprep.subr.mxu0 0.0
    %1760 = vmatpush1.msra.mxu0 0.0
    %1761 = vmatprep.subr.mxu0 0.0
    %1762 = vmatpush1.msra.mxu0 0.0
    %1763 = vmatprep.subr.mxu0 0.0
    %1764 = vmatpush1.msra.mxu0 0.0
    %1765 = vmatprep.subr.mxu0 0.0
    %1766 = vmatpush1.msra.mxu0 0.0
    %1767 = vmatprep.subr.mxu0 0.0
    %1768 = vmatpush1.msra.mxu0 0.0
    %1769 = vmatprep.subr.mxu0 0.0
    %1770 = vmatpush1.msra.mxu0 0.0
    %1771 = vmatprep.subr.mxu0 0.0
    %1772 = vmatpush1.msra.mxu0 0.0
    %1773 = vmatprep.subr.mxu0 0.0
    %1774 = vmatpush1.msra.mxu0 0.0
    %1775 = vmatprep.mubr.f32.mxu0 0.0
    %1776 = vmatmul.mubr.f32.gmra.mrb[0].mxu0 %v1633
    %v1777 = vpop.f32.mrb[0].mxu0
    %v1778 = vadd.f32 0.0, %v1777
    %v1779 = vpop.f32.mrb[0].mxu0
    %1780 = vdwg.mxu0
    %v1781 = vadd.f32 %v1637, %v1707
    %v1782 = vxor.u32 %v1781, 2147483648
    %v1783 = vmul.f32 %v1782, 1.442695
    %v1784 = vpow.pop %v1783
    %v1785 = vadd.f32 %v1784, 1.0
    %v1786 = vrcp.pop %v1785
    %v1787 = vmul.f32 1.0, %v1786
    %v1788 = vadd.f32 %v1638, %v1709
    %v1789 = vxor.u32 %v1788, 2147483648
    %v1790 = vmul.f32 %v1789, 1.442695
    %v1791 = vpow.pop %v1790
    %v1792 = vadd.f32 %v1791, 1.0
    %v1793 = vrcp.pop %v1792
    %v1794 = vmul.f32 1.0, %v1793
    %v1795 = vadd.f32 %v1778, %v455
    %v1796 = vmul.f32 %v1787, %v1795
    %v1797 = vadd.f32 %v1639, %v1796
    %v1798 = vtanh.pop %v1797
    %v1799 = vsub.f32 %v1633, %v1798
    %v1800 = vmul.f32 %v1794, %v1799
    %v1801 = vadd.f32 %v1798, %v1800
    %1802 = vst [vmem:[#allocation3] sm:$0xff] %v1801
    // Predicated region
    $region50: #{tpu_custom_call.1} parent=1 // pred_check
      %p1803 = pneg %p82
    $region51: #{tpu_custom_call.1} parent=1 // pred_check_branch
      %1805 = sbr.rel (%p1803) target = $region53
    $region52: #{tpu_custom_call.1} parent=1 // pred_region
      %v1806 = vld [vmem:[#allocation10] sm:$0xff]
      %v1807 = vld [vmem:[#allocation10 + $0x8] sm:$0xff]
      %v1808 = vld [vmem:[#allocation10 + $0x10] sm:$0xff]
      %v1809 = vld [vmem:[#allocation10 + $0x18] sm:$0xff]
      %v1810 = vld [vmem:[#allocation10 + $0x20] sm:$0xff]
      %v1811 = vld [vmem:[#allocation10 + $0x28] sm:$0xff]
      %v1812 = vld [vmem:[#allocation10 + $0x30] sm:$0xff]
      %v1813 = vld [vmem:[#allocation10 + $0x38] sm:$0xff]
      %v1814 = vld [vmem:[#allocation10 + $0x40] sm:$0xff]
      %v1815 = vld [vmem:[#allocation10 + $0x48] sm:$0xff]
      %v1816 = vld [vmem:[#allocation10 + $0x50] sm:$0xff]
      %v1817 = vld [vmem:[#allocation10 + $0x58] sm:$0xff]
      %v1818 = vld [vmem:[#allocation10 + $0x60] sm:$0xff]
      %v1819 = vld [vmem:[#allocation10 + $0x68] sm:$0xff]
      %v1820 = vld [vmem:[#allocation10 + $0x70] sm:$0xff]
      %v1821 = vld [vmem:[#allocation10 + $0x78] sm:$0xff]
      %v1822 = vld [vmem:[%s6] sm:$0x1]
      %v1824 = vlaneseq
      %v1825 = vshrl.u32 %v1824, 7
      %v1826 = vsub.s32 0, %v1825
      %v1827 = vrot.slane %v1822, %v1826
      %1829 = vmatprep.subr.mxu0 0.0
      %1830 = vmatpush1.msra.mxu0 %v1806
      %1831 = vmatprep.subr.mxu0 0.0
      %1832 = vmatpush1.msra.mxu0 %v1807
      %1833 = vmatprep.subr.mxu0 0.0
      %1834 = vmatpush1.msra.mxu0 %v1808
      %1835 = vmatprep.subr.mxu0 0.0
      %1836 = vmatpush1.msra.mxu0 %v1809
      %1837 = vmatprep.subr.mxu0 0.0
      %1838 = vmatpush1.msra.mxu0 %v1810
      %1839 = vmatprep.subr.mxu0 0.0
      %1840 = vmatpush1.msra.mxu0 %v1811
      %1841 = vmatprep.subr.mxu0 0.0
      %1842 = vmatpush1.msra.mxu0 %v1812
      %1843 = vmatprep.subr.mxu0 0.0
      %1844 = vmatpush1.msra.mxu0 %v1813
      %1845 = vmatprep.subr.mxu0 0.0
      %1846 = vmatpush1.msra.mxu0 %v1814
      %1847 = vmatprep.subr.mxu0 0.0
      %1848 = vmatpush1.msra.mxu0 %v1815
      %1849 = vmatprep.subr.mxu0 0.0
      %1850 = vmatpush1.msra.mxu0 %v1816
      %1851 = vmatprep.subr.mxu0 0.0
      %1852 = vmatpush1.msra.mxu0 %v1817
      %1853 = vmatprep.subr.mxu0 0.0
      %1854 = vmatpush1.msra.mxu0 %v1818
      %1855 = vmatprep.subr.mxu0 0.0
      %1856 = vmatpush1.msra.mxu0 %v1819
      %1857 = vmatprep.subr.mxu0 0.0
      %1858 = vmatpush1.msra.mxu0 %v1820
      %1859 = vmatprep.subr.mxu0 0.0
      %1860 = vmatpush1.msra.mxu0 %v1821
      %1861 = vmatprep.subr.mxu0 0.0
      %1862 = vmatpush1.msra.mxu0 0.0
      %1863 = vmatprep.subr.mxu0 0.0
      %1864 = vmatpush1.msra.mxu0 0.0
      %1865 = vmatprep.subr.mxu0 0.0
      %1866 = vmatpush1.msra.mxu0 0.0
      %1867 = vmatprep.subr.mxu0 0.0
      %1868 = vmatpush1.msra.mxu0 0.0
      %1869 = vmatprep.subr.mxu0 0.0
      %1870 = vmatpush1.msra.mxu0 0.0
      %1871 = vmatprep.subr.mxu0 0.0
      %1872 = vmatpush1.msra.mxu0 0.0
      %1873 = vmatprep.subr.mxu0 0.0
      %1874 = vmatpush1.msra.mxu0 0.0
      %1875 = vmatprep.subr.mxu0 0.0
      %1876 = vmatpush1.msra.mxu0 0.0
      %1877 = vmatprep.subr.mxu0 0.0
      %1878 = vmatpush1.msra.mxu0 0.0
      %1879 = vmatprep.subr.mxu0 0.0
      %1880 = vmatpush1.msra.mxu0 0.0
      %1881 = vmatprep.subr.mxu0 0.0
      %1882 = vmatpush1.msra.mxu0 0.0
      %1883 = vmatprep.subr.mxu0 0.0
      %1884 = vmatpush1.msra.mxu0 0.0
      %1885 = vmatprep.subr.mxu0 0.0
      %1886 = vmatpush1.msra.mxu0 0.0
      %1887 = vmatprep.subr.mxu0 0.0
      %1888 = vmatpush1.msra.mxu0 0.0
      %1889 = vmatprep.subr.mxu0 0.0
      %1890 = vmatpush1.msra.mxu0 0.0
      %1891 = vmatprep.subr.mxu0 0.0
      %1892 = vmatpush1.msra.mxu0 0.0
      %1893 = vmatprep.mubr.f32.mxu0 0.0
      %1894 = vmatmul.mubr.f32.gmra.mrb[0].mxu0 %v1801
      %v1895 = vpop.f32.mrb[0].mxu0
      %v1896 = vadd.f32 %v1827, %v1895
      %v1897 = vpop.f32.mrb[0].mxu0
      %1898 = vdwg.mxu0
      %v1899 = vxor.u32 %v1896, 2147483648
      %v1900 = vmul.f32 %v1899, 1.442695
      %v1901 = vpow.pop %v1900
      %v1902 = vadd.f32 %v1901, 1.0
      %v1903 = vrcp.pop %v1902
      %v1904 = vmul.f32 1.0, %v1903
      %1905 = vst [vmem:[#allocation12] sm:$0xff] %v1904
    $region53: #{tpu_custom_call.1} parent=1 // pred_fallthru
      _
    // Predicated region
    $region54: #{tpu_custom_call.1} parent=1 // pred_check
      _
    $region55: #{tpu_custom_call.1} parent=1 // pred_check_branch
      %1907 = sbr.rel (0) target = $region57
    $region56: #{tpu_custom_call.1} parent=1 // pred_region
      %s1909 = ssub.s32 128, 128
      %1910 = vsyncadd [#allocation6], %s1909
      %s1912 = sshll.u32 [#allocation12], 4
      %s1913 = int_to_ptr.vmem [resolvable:$true] %s1912
      %1915 = dma.vmem_to_hbm [thread:$0]  %s1913, 128, %s7, [#allocation6]
    $region57: #{tpu_custom_call.1} parent=1 // pred_fallthru
      _
    // Predicated region
    $region58: #{tpu_custom_call.1} parent=1 // pred_check
      _
    $region59: #{tpu_custom_call.1} parent=1 // pred_check_branch
      %1917 = sbr.rel (0) target = $region61
    $region60: #{tpu_custom_call.1} parent=1 // pred_region
      %1918 = dma.done [#allocation6], 128
    $region61: #{tpu_custom_call.1} parent=1 // pred_fallthru
      _
    %1919 = vsyncpa [#allocation5], 1
    %1920 = vsyncpa [#allocation8], 1
    %1921 = vsyncpa [#allocation11], 1
    %1922 = vsyncpa [#allocation6], 1

</llo_original>
